<compile_context>
chip_gen: v7x
topology: tpu7x:2x2x1
jax: 0.10.0
libtpu: 0.0.40
codegen_flags: <defaults>
</compile_context>

<pallas_src>
import functools

import jax
import jax.numpy as jnp
from jax import lax
from jax.experimental import pallas as pl
from jax.experimental.pallas import tpu as pltpu
import numpy as np


def _round_up(x, m):
    return (x + m - 1) // m * m


def _pick_h_tile(h):
    # Largest "nice" row tile that divides H and still leaves >= 2 tiles so the
    # pipeline has something to overlap.  Capped at 64 rows so the f32
    # accumulator + double-buffered blocks stay well inside v7x scoped VMEM.
    for cand in (64, 32, 16, 8, 4, 2):
        if cand < h and h % cand == 0:
            return cand
    return h


# --------------------------------------------------------------------------
# Phase A: conv (3x3, stride 1) + per-tile BN partial statistics.
# --------------------------------------------------------------------------
def _conv_stats_kernel(x_ref, w_ref, out_ref, stats_ref, acc_ref, *, kh, kw):
    # x_ref:     (TH + kh - 1, W + kw - 1, Cin)   padded input row-window
    # w_ref:     (kh, kw, Cin, C)                 C = Cout padded to 128
    # out_ref:   (TH, W, C)                       raw conv output (lane-dense)
    # stats_ref: (8, C)                           row 0: sum, row 1: sum of sq
    # acc_ref:   VMEM scratch (TH*W, C) float32
    th, wo, c = out_ref.shape
    cin = x_ref.shape[-1]

    acc_ref[...] = jnp.zeros_like(acc_ref)

    # Conv as a sum of shifted MXU matmuls, accumulated into the VMEM scratch.
    # The W-shifted slice is hoisted out of the inner loop (3 slices instead of
    # 9); the remaining per-tap slice is along the outermost (row) axis only.
    for j in range(kw):
        xj = x_ref[:, j:j + wo, :]                       # (TH+kh-1, W, Cin)
        for i in range(kh):
            xs = xj[i:i + th].reshape(th * wo, cin)      # (TH*W, Cin)
            acc_ref[...] += jnp.dot(xs, w_ref[i, j],
                                    preferred_element_type=jnp.float32)

    acc = acc_ref[...]
    out_ref[...] = acc.reshape(th, wo, c)

    # Per-tile partial BN statistics (finalized outside, across all tiles).
    s = jnp.sum(acc, axis=0, keepdims=True)              # (1, C)
    sq = jnp.sum(acc * acc, axis=0, keepdims=True)       # (1, C)
    stats_ref[...] = jnp.concatenate(
        [s, sq, jnp.zeros((6, c), jnp.float32)], axis=0)


# --------------------------------------------------------------------------
# Phase B: apply BatchNorm affine  y * scale + shift  (per channel).
# --------------------------------------------------------------------------
def _bn_apply_kernel(y_ref, scale_ref, shift_ref, out_ref):
    # y_ref/out_ref: (TH, W, C);  scale_ref/shift_ref: (1, C)
    out_ref[...] = y_ref[...] * scale_ref[...] + shift_ref[...]


def conv_bn(x_nchw, weight_oihw, gamma, beta, *, stride=1, eps=1e-5):
    # TODO(synk): only stride=1 (the ConvBN default) is implemented.
    assert stride == 1, "stride != 1 not implemented"
    N, Cin, H, W = x_nchw.shape
    Cout, Cin_w, KH, KW = weight_oihw.shape
    assert Cin == Cin_w
    pad_h, pad_w = KH // 2, KW // 2

    C = _round_up(Cout, 128)           # lane-dense padded channel count
    TH = _pick_h_tile(H)               # output rows per grid tile
    HT = H // TH
    THp = TH + KH - 1                  # input rows per tile (with halo)
    Wp = W + KW - 1                    # padded width

    # ---- layout glue (plain JAX; boundary is NCHW per the PyTorch module) ----
    x = jnp.transpose(x_nchw, (0, 2, 3, 1)).astype(jnp.float32)       # NHWC
    x = jnp.pad(x, ((0, 0), (pad_h, pad_h), (pad_w, pad_w), (0, 0)))
    # Overlapping H row-windows: tile t covers padded rows [t*TH, t*TH+TH+KH-1)
    x_tiles = jnp.stack(
        [x[:, t * TH: t * TH + THp] for t in range(HT)], axis=1)
    # x_tiles: (N, HT, THp, Wp, Cin)

    w = jnp.transpose(weight_oihw, (2, 3, 1, 0)).astype(jnp.float32)  # (KH,KW,Cin,Cout)
    w = jnp.pad(w, ((0, 0), (0, 0), (0, 0), (0, C - Cout)))           # -> (..., C)

    # ---- phase A: conv + per-tile partial stats -----------------------------
    kernel_a = functools.partial(_conv_stats_kernel, kh=KH, kw=KW)
    flops_a = 2 * N * H * W * KH * KW * Cin * C
    bytes_a = (x_tiles.size + w.size + N * H * W * C + N * HT * 8 * C) * 4

    conv_out, stats = pl.pallas_call(
        kernel_a,
        out_shape=(
            jax.ShapeDtypeStruct((N, HT, TH, W, C), jnp.float32),
            jax.ShapeDtypeStruct((N, HT, 8, C), jnp.float32),
        ),
        grid_spec=pltpu.PrefetchScalarGridSpec(
            num_scalar_prefetch=0,
            grid=(N, HT),
            in_specs=[
                pl.BlockSpec((None, None, THp, Wp, Cin),
                             lambda n, t: (n, t, 0, 0, 0)),
                pl.BlockSpec((KH, KW, Cin, C),
                             lambda n, t: (0, 0, 0, 0)),
            ],
            out_specs=[
                pl.BlockSpec((None, None, TH, W, C),
                             lambda n, t: (n, t, 0, 0, 0)),
                pl.BlockSpec((None, None, 8, C),
                             lambda n, t: (n, t, 0, 0)),
            ],
            scratch_shapes=[pltpu.VMEM((TH * W, C), jnp.float32)],
        ),
        compiler_params=pltpu.CompilerParams(
            dimension_semantics=("parallel", "parallel"),
            vmem_limit_bytes=32 * 1024 * 1024,   # v7x-safe scoped VMEM budget
        ),
        cost_estimate=pl.CostEstimate(
            flops=flops_a, transcendentals=0, bytes_accessed=bytes_a),
    )(x_tiles, w)

    # ---- BN finalize (tiny, O(C)): mean/var -> scale/shift -------------------
    count = jnp.float32(N * H * W)
    ssum = jnp.sum(stats[:, :, 0, :], axis=(0, 1))          # (C,)
    ssq = jnp.sum(stats[:, :, 1, :], axis=(0, 1))           # (C,)
    mean = ssum / count
    # Biased (training-mode) variance.  Clamp guards the E[x^2]-mean^2 form
    # against tiny negative values from cancellation.
    var = jnp.maximum(ssq / count - mean * mean, 0.0)
    inv_std = lax.rsqrt(var + eps)
    g = jnp.pad(gamma.astype(jnp.float32), (0, C - Cout))
    b = jnp.pad(beta.astype(jnp.float32), (0, C - Cout))
    scale = (g * inv_std).reshape(1, C)
    shift = (b - mean * g * inv_std).reshape(1, C)

    # ---- phase B: apply affine (tiled elementwise) ---------------------------
    out5 = pl.pallas_call(
        _bn_apply_kernel,
        out_shape=jax.ShapeDtypeStruct((N, HT, TH, W, C), jnp.float32),
        grid_spec=pltpu.PrefetchScalarGridSpec(
            num_scalar_prefetch=0,
            grid=(N, HT),
            in_specs=[
                pl.BlockSpec((None, None, TH, W, C),
                             lambda n, t: (n, t, 0, 0, 0)),
                pl.BlockSpec((1, C), lambda n, t: (0, 0)),
                pl.BlockSpec((1, C), lambda n, t: (0, 0)),
            ],
            out_specs=pl.BlockSpec((None, None, TH, W, C),
                                   lambda n, t: (n, t, 0, 0, 0)),
        ),
        compiler_params=pltpu.CompilerParams(
            dimension_semantics=("parallel", "parallel"),
            vmem_limit_bytes=32 * 1024 * 1024,
        ),
        cost_estimate=pl.CostEstimate(
            flops=2 * N * H * W * C, transcendentals=0,
            bytes_accessed=2 * N * H * W * C * 4),
    )(conv_out, scale, shift)

    out = out5.reshape(N, H, W, C)[..., :Cout]
    return jnp.transpose(out, (0, 3, 1, 2))                 # back to NCHW


def _reference(x_nchw, weight_oihw, gamma, beta, eps=1e-5):
    # Pure-JAX reference: conv (NCHW) + training-mode batchnorm.
    out = lax.conv_general_dilated(
        x_nchw.astype(jnp.float32), weight_oihw.astype(jnp.float32),
        window_strides=(1, 1), padding="SAME",
        dimension_numbers=("NCHW", "OIHW", "NCHW"))
    mean = jnp.mean(out, axis=(0, 2, 3), keepdims=True)
    var = jnp.mean((out - mean) ** 2, axis=(0, 2, 3), keepdims=True)
    g = gamma.reshape(1, -1, 1, 1)
    b = beta.reshape(1, -1, 1, 1)
    return (out - mean) * lax.rsqrt(var + eps) * g + b


if __name__ == "__main__":
    key = jax.random.PRNGKey(0)
    k_x, k_w, k_g, k_b = jax.random.split(key, 4)

    N, Cin, H, W = 2, 4, 16, 16
    Cout, K = 8, 3

    x = jax.random.normal(k_x, (N, Cin, H, W), dtype=jnp.float32)
    weight = 0.1 * jax.random.normal(k_w, (Cout, Cin, K, K), dtype=jnp.float32)
    gamma = 1.0 + 0.1 * jax.random.normal(k_g, (Cout,), dtype=jnp.float32)
    beta = 0.1 * jax.random.normal(k_b, (Cout,), dtype=jnp.float32)

    out = jax.block_until_ready(conv_bn(x, weight, gamma, beta))
    ref = jax.block_until_ready(_reference(x, weight, gamma, beta))
    np.testing.assert_allclose(np.asarray(out), np.asarray(ref),
                               rtol=1e-4, atol=1e-4)
    print("KERNEL_OK")
</pallas_src>

<mosaic_0001>
module attributes {stable_mosaic.version = 11 : i64} {
  func.func @_conv_stats_kernel(%arg0: i32, %arg1: i32, %arg2: memref<1x1x10x18x4xf32, #tpu.memory_space<vmem>>, %arg3: memref<3x3x4x128xf32, #tpu.memory_space<vmem>>, %arg4: memref<1x1x8x16x128xf32, #tpu.memory_space<vmem>>, %arg5: memref<1x1x8x128xf32, #tpu.memory_space<vmem>>, %arg6: memref<128x128xf32, #tpu.memory_space<vmem>>) attributes {dimension_semantics = [#tpu.dimension_semantics<parallel>, #tpu.dimension_semantics<parallel>], iteration_bounds = array<i64: 2, 2>, scalar_prefetch = 0 : i64, scratch_operands = 1 : i64, tpu.core_type = #tpu.core_type<tc>, window_params = [{transform_indices = @transform_0, window_bounds = array<i64: 1, 1, 10, 18, 4>}, {pipeline_mode = #tpu.pipeline_mode<synchronous>, transform_indices = @transform_1, window_bounds = array<i64: 3, 3, 4, 128>}, {transform_indices = @transform_2, window_bounds = array<i64: 1, 1, 8, 16, 128>}, {transform_indices = @transform_3, window_bounds = array<i64: 1, 1, 8, 128>}]} {
    %cst = arith.constant 0.000000e+00 : f32
    %0 = vector.broadcast %cst : f32 to vector<128x128xf32>
    %c0 = arith.constant 0 : index
    %c0_0 = arith.constant 0 : index
    %1 = vector.load %arg6[%c0, %c0_0] : memref<128x128xf32, #tpu.memory_space<vmem>>, vector<128x128xf32>
    tpu.vector_store %arg6[%c0, %c0_0], %0 {strides = array<i32>} : memref<128x128xf32, #tpu.memory_space<vmem>>, vector<128x128xf32>,
    %c0_1 = arith.constant 0 : index
    %c0_2 = arith.constant 0 : index
    %c0_3 = arith.constant 0 : index
    %c0_4 = arith.constant 0 : index
    %c0_5 = arith.constant 0 : index
    %2 = vector.load %arg2[%c0_1, %c0_2, %c0_3, %c0_4, %c0_5] : memref<1x1x10x18x4xf32, #tpu.memory_space<vmem>>, vector<1x1x10x16x4xf32>
    %3 = vector.shape_cast %2 : vector<1x1x10x16x4xf32> to vector<10x16x4xf32>
    %4 = vector.extract_strided_slice %3 {offsets = [0, 0, 0], sizes = [8, 16, 4], strides = [1, 1, 1]} : vector<10x16x4xf32> to vector<8x16x4xf32>
    %5 = vector.shape_cast %4 : vector<8x16x4xf32> to vector<128x4xf32>
    %c0_6 = arith.constant 0 : index
    %c0_7 = arith.constant 0 : index
    %6 = vector.load %arg6[%c0_6, %c0_7] : memref<128x128xf32, #tpu.memory_space<vmem>>, vector<128x128xf32>
    %c0_8 = arith.constant 0 : index
    %c0_9 = arith.constant 0 : index
    %c0_10 = arith.constant 0 : index
    %c0_11 = arith.constant 0 : index
    %7 = vector.load %arg3[%c0_8, %c0_9, %c0_10, %c0_11] : memref<3x3x4x128xf32, #tpu.memory_space<vmem>>, vector<1x1x4x128xf32>
    %8 = vector.shape_cast %7 : vector<1x1x4x128xf32> to vector<4x128xf32>
    %cst_12 = arith.constant dense<0.000000e+00> : vector<128x128xf32>
    %9 = tpu.matmul %5, %8, %cst_12 {dimension_numbers = #tpu.dot_dimension_numbers<[1], [0], [0], [1], [0, 0, 1, 1], [], []>} : vector<128x4xf32>, vector<4x128xf32>, vector<128x128xf32> -> vector<128x128xf32>
    %10 = arith.addf %6, %9 : vector<128x128xf32>
    %c0_13 = arith.constant 0 : index
    %c0_14 = arith.constant 0 : index
    %11 = vector.load %arg6[%c0_13, %c0_14] : memref<128x128xf32, #tpu.memory_space<vmem>>, vector<128x128xf32>
    tpu.vector_store %arg6[%c0_13, %c0_14], %10 {strides = array<i32>} : memref<128x128xf32, #tpu.memory_space<vmem>>, vector<128x128xf32>,
    %12 = vector.extract_strided_slice %3 {offsets = [1, 0, 0], sizes = [8, 16, 4], strides = [1, 1, 1]} : vector<10x16x4xf32> to vector<8x16x4xf32>
    %13 = vector.shape_cast %12 : vector<8x16x4xf32> to vector<128x4xf32>
    %c0_15 = arith.constant 0 : index
    %c0_16 = arith.constant 0 : index
    %14 = vector.load %arg6[%c0_15, %c0_16] : memref<128x128xf32, #tpu.memory_space<vmem>>, vector<128x128xf32>
    %c1 = arith.constant 1 : index
    %c0_17 = arith.constant 0 : index
    %c0_18 = arith.constant 0 : index
    %c0_19 = arith.constant 0 : index
    %15 = vector.load %arg3[%c1, %c0_17, %c0_18, %c0_19] : memref<3x3x4x128xf32, #tpu.memory_space<vmem>>, vector<1x1x4x128xf32>
    %16 = vector.shape_cast %15 : vector<1x1x4x128xf32> to vector<4x128xf32>
    %cst_20 = arith.constant dense<0.000000e+00> : vector<128x128xf32>
    %17 = tpu.matmul %13, %16, %cst_20 {dimension_numbers = #tpu.dot_dimension_numbers<[1], [0], [0], [1], [0, 0, 1, 1], [], []>} : vector<128x4xf32>, vector<4x128xf32>, vector<128x128xf32> -> vector<128x128xf32>
    %18 = arith.addf %14, %17 : vector<128x128xf32>
    %c0_21 = arith.constant 0 : index
    %c0_22 = arith.constant 0 : index
    %19 = vector.load %arg6[%c0_21, %c0_22] : memref<128x128xf32, #tpu.memory_space<vmem>>, vector<128x128xf32>
    tpu.vector_store %arg6[%c0_21, %c0_22], %18 {strides = array<i32>} : memref<128x128xf32, #tpu.memory_space<vmem>>, vector<128x128xf32>,
    %20 = vector.extract_strided_slice %3 {offsets = [2, 0, 0], sizes = [8, 16, 4], strides = [1, 1, 1]} : vector<10x16x4xf32> to vector<8x16x4xf32>
    %21 = vector.shape_cast %20 : vector<8x16x4xf32> to vector<128x4xf32>
    %c0_23 = arith.constant 0 : index
    %c0_24 = arith.constant 0 : index
    %22 = vector.load %arg6[%c0_23, %c0_24] : memref<128x128xf32, #tpu.memory_space<vmem>>, vector<128x128xf32>
    %c2 = arith.constant 2 : index
    %c0_25 = arith.constant 0 : index
    %c0_26 = arith.constant 0 : index
    %c0_27 = arith.constant 0 : index
    %23 = vector.load %arg3[%c2, %c0_25, %c0_26, %c0_27] : memref<3x3x4x128xf32, #tpu.memory_space<vmem>>, vector<1x1x4x128xf32>
    %24 = vector.shape_cast %23 : vector<1x1x4x128xf32> to vector<4x128xf32>
    %cst_28 = arith.constant dense<0.000000e+00> : vector<128x128xf32>
    %25 = tpu.matmul %21, %24, %cst_28 {dimension_numbers = #tpu.dot_dimension_numbers<[1], [0], [0], [1], [0, 0, 1, 1], [], []>} : vector<128x4xf32>, vector<4x128xf32>, vector<128x128xf32> -> vector<128x128xf32>
    %26 = arith.addf %22, %25 : vector<128x128xf32>
    %c0_29 = arith.constant 0 : index
    %c0_30 = arith.constant 0 : index
    %27 = vector.load %arg6[%c0_29, %c0_30] : memref<128x128xf32, #tpu.memory_space<vmem>>, vector<128x128xf32>
    tpu.vector_store %arg6[%c0_29, %c0_30], %26 {strides = array<i32>} : memref<128x128xf32, #tpu.memory_space<vmem>>, vector<128x128xf32>,
    %c0_31 = arith.constant 0 : index
    %c0_32 = arith.constant 0 : index
    %c0_33 = arith.constant 0 : index
    %c1_34 = arith.constant 1 : index
    %c0_35 = arith.constant 0 : index
    %28 = vector.load %arg2[%c0_31, %c0_32, %c0_33, %c1_34, %c0_35] : memref<1x1x10x18x4xf32, #tpu.memory_space<vmem>>, vector<1x1x10x16x4xf32>
    %29 = vector.shape_cast %28 : vector<1x1x10x16x4xf32> to vector<10x16x4xf32>
    %30 = vector.extract_strided_slice %29 {offsets = [0, 0, 0], sizes = [8, 16, 4], strides = [1, 1, 1]} : vector<10x16x4xf32> to vector<8x16x4xf32>
    %31 = vector.shape_cast %30 : vector<8x16x4xf32> to vector<128x4xf32>
    %c0_36 = arith.constant 0 : index
    %c0_37 = arith.constant 0 : index
    %32 = vector.load %arg6[%c0_36, %c0_37] : memref<128x128xf32, #tpu.memory_space<vmem>>, vector<128x128xf32>
    %c0_38 = arith.constant 0 : index
    %c1_39 = arith.constant 1 : index
    %c0_40 = arith.constant 0 : index
    %c0_41 = arith.constant 0 : index
    %33 = vector.load %arg3[%c0_38, %c1_39, %c0_40, %c0_41] : memref<3x3x4x128xf32, #tpu.memory_space<vmem>>, vector<1x1x4x128xf32>
    %34 = vector.shape_cast %33 : vector<1x1x4x128xf32> to vector<4x128xf32>
    %cst_42 = arith.constant dense<0.000000e+00> : vector<128x128xf32>
    %35 = tpu.matmul %31, %34, %cst_42 {dimension_numbers = #tpu.dot_dimension_numbers<[1], [0], [0], [1], [0, 0, 1, 1], [], []>} : vector<128x4xf32>, vector<4x128xf32>, vector<128x128xf32> -> vector<128x128xf32>
    %36 = arith.addf %32, %35 : vector<128x128xf32>
    %c0_43 = arith.constant 0 : index
    %c0_44 = arith.constant 0 : index
    %37 = vector.load %arg6[%c0_43, %c0_44] : memref<128x128xf32, #tpu.memory_space<vmem>>, vector<128x128xf32>
    tpu.vector_store %arg6[%c0_43, %c0_44], %36 {strides = array<i32>} : memref<128x128xf32, #tpu.memory_space<vmem>>, vector<128x128xf32>,
    %38 = vector.extract_strided_slice %29 {offsets = [1, 0, 0], sizes = [8, 16, 4], strides = [1, 1, 1]} : vector<10x16x4xf32> to vector<8x16x4xf32>
    %39 = vector.shape_cast %38 : vector<8x16x4xf32> to vector<128x4xf32>
    %c0_45 = arith.constant 0 : index
    %c0_46 = arith.constant 0 : index
    %40 = vector.load %arg6[%c0_45, %c0_46] : memref<128x128xf32, #tpu.memory_space<vmem>>, vector<128x128xf32>
    %c1_47 = arith.constant 1 : index
    %c1_48 = arith.constant 1 : index
    %c0_49 = arith.constant 0 : index
    %c0_50 = arith.constant 0 : index
    %41 = vector.load %arg3[%c1_47, %c1_48, %c0_49, %c0_50] : memref<3x3x4x128xf32, #tpu.memory_space<vmem>>, vector<1x1x4x128xf32>
    %42 = vector.shape_cast %41 : vector<1x1x4x128xf32> to vector<4x128xf32>
    %cst_51 = arith.constant dense<0.000000e+00> : vector<128x128xf32>
    %43 = tpu.matmul %39, %42, %cst_51 {dimension_numbers = #tpu.dot_dimension_numbers<[1], [0], [0], [1], [0, 0, 1, 1], [], []>} : vector<128x4xf32>, vector<4x128xf32>, vector<128x128xf32> -> vector<128x128xf32>
    %44 = arith.addf %40, %43 : vector<128x128xf32>
    %c0_52 = arith.constant 0 : index
    %c0_53 = arith.constant 0 : index
    %45 = vector.load %arg6[%c0_52, %c0_53] : memref<128x128xf32, #tpu.memory_space<vmem>>, vector<128x128xf32>
    tpu.vector_store %arg6[%c0_52, %c0_53], %44 {strides = array<i32>} : memref<128x128xf32, #tpu.memory_space<vmem>>, vector<128x128xf32>,
    %46 = vector.extract_strided_slice %29 {offsets = [2, 0, 0], sizes = [8, 16, 4], strides = [1, 1, 1]} : vector<10x16x4xf32> to vector<8x16x4xf32>
    %47 = vector.shape_cast %46 : vector<8x16x4xf32> to vector<128x4xf32>
    %c0_54 = arith.constant 0 : index
    %c0_55 = arith.constant 0 : index
    %48 = vector.load %arg6[%c0_54, %c0_55] : memref<128x128xf32, #tpu.memory_space<vmem>>, vector<128x128xf32>
    %c2_56 = arith.constant 2 : index
    %c1_57 = arith.constant 1 : index
    %c0_58 = arith.constant 0 : index
    %c0_59 = arith.constant 0 : index
    %49 = vector.load %arg3[%c2_56, %c1_57, %c0_58, %c0_59] : memref<3x3x4x128xf32, #tpu.memory_space<vmem>>, vector<1x1x4x128xf32>
    %50 = vector.shape_cast %49 : vector<1x1x4x128xf32> to vector<4x128xf32>
    %cst_60 = arith.constant dense<0.000000e+00> : vector<128x128xf32>
    %51 = tpu.matmul %47, %50, %cst_60 {dimension_numbers = #tpu.dot_dimension_numbers<[1], [0], [0], [1], [0, 0, 1, 1], [], []>} : vector<128x4xf32>, vector<4x128xf32>, vector<128x128xf32> -> vector<128x128xf32>
    %52 = arith.addf %48, %51 : vector<128x128xf32>
    %c0_61 = arith.constant 0 : index
    %c0_62 = arith.constant 0 : index
    %53 = vector.load %arg6[%c0_61, %c0_62] : memref<128x128xf32, #tpu.memory_space<vmem>>, vector<128x128xf32>
    tpu.vector_store %arg6[%c0_61, %c0_62], %52 {strides = array<i32>} : memref<128x128xf32, #tpu.memory_space<vmem>>, vector<128x128xf32>,
    %c0_63 = arith.constant 0 : index
    %c0_64 = arith.constant 0 : index
    %c0_65 = arith.constant 0 : index
    %c2_66 = arith.constant 2 : index
    %c0_67 = arith.constant 0 : index
    %54 = vector.load %arg2[%c0_63, %c0_64, %c0_65, %c2_66, %c0_67] : memref<1x1x10x18x4xf32, #tpu.memory_space<vmem>>, vector<1x1x10x16x4xf32>
    %55 = vector.shape_cast %54 : vector<1x1x10x16x4xf32> to vector<10x16x4xf32>
    %56 = vector.extract_strided_slice %55 {offsets = [0, 0, 0], sizes = [8, 16, 4], strides = [1, 1, 1]} : vector<10x16x4xf32> to vector<8x16x4xf32>
    %57 = vector.shape_cast %56 : vector<8x16x4xf32> to vector<128x4xf32>
    %c0_68 = arith.constant 0 : index
    %c0_69 = arith.constant 0 : index
    %58 = vector.load %arg6[%c0_68, %c0_69] : memref<128x128xf32, #tpu.memory_space<vmem>>, vector<128x128xf32>
    %c0_70 = arith.constant 0 : index
    %c2_71 = arith.constant 2 : index
    %c0_72 = arith.constant 0 : index
    %c0_73 = arith.constant 0 : index
    %59 = vector.load %arg3[%c0_70, %c2_71, %c0_72, %c0_73] : memref<3x3x4x128xf32, #tpu.memory_space<vmem>>, vector<1x1x4x128xf32>
    %60 = vector.shape_cast %59 : vector<1x1x4x128xf32> to vector<4x128xf32>
    %cst_74 = arith.constant dense<0.000000e+00> : vector<128x128xf32>
    %61 = tpu.matmul %57, %60, %cst_74 {dimension_numbers = #tpu.dot_dimension_numbers<[1], [0], [0], [1], [0, 0, 1, 1], [], []>} : vector<128x4xf32>, vector<4x128xf32>, vector<128x128xf32> -> vector<128x128xf32>
    %62 = arith.addf %58, %61 : vector<128x128xf32>
    %c0_75 = arith.constant 0 : index
    %c0_76 = arith.constant 0 : index
    %63 = vector.load %arg6[%c0_75, %c0_76] : memref<128x128xf32, #tpu.memory_space<vmem>>, vector<128x128xf32>
    tpu.vector_store %arg6[%c0_75, %c0_76], %62 {strides = array<i32>} : memref<128x128xf32, #tpu.memory_space<vmem>>, vector<128x128xf32>,
    %64 = vector.extract_strided_slice %55 {offsets = [1, 0, 0], sizes = [8, 16, 4], strides = [1, 1, 1]} : vector<10x16x4xf32> to vector<8x16x4xf32>
    %65 = vector.shape_cast %64 : vector<8x16x4xf32> to vector<128x4xf32>
    %c0_77 = arith.constant 0 : index
    %c0_78 = arith.constant 0 : index
    %66 = vector.load %arg6[%c0_77, %c0_78] : memref<128x128xf32, #tpu.memory_space<vmem>>, vector<128x128xf32>
    %c1_79 = arith.constant 1 : index
    %c2_80 = arith.constant 2 : index
    %c0_81 = arith.constant 0 : index
    %c0_82 = arith.constant 0 : index
    %67 = vector.load %arg3[%c1_79, %c2_80, %c0_81, %c0_82] : memref<3x3x4x128xf32, #tpu.memory_space<vmem>>, vector<1x1x4x128xf32>
    %68 = vector.shape_cast %67 : vector<1x1x4x128xf32> to vector<4x128xf32>
    %cst_83 = arith.constant dense<0.000000e+00> : vector<128x128xf32>
    %69 = tpu.matmul %65, %68, %cst_83 {dimension_numbers = #tpu.dot_dimension_numbers<[1], [0], [0], [1], [0, 0, 1, 1], [], []>} : vector<128x4xf32>, vector<4x128xf32>, vector<128x128xf32> -> vector<128x128xf32>
    %70 = arith.addf %66, %69 : vector<128x128xf32>
    %c0_84 = arith.constant 0 : index
    %c0_85 = arith.constant 0 : index
    %71 = vector.load %arg6[%c0_84, %c0_85] : memref<128x128xf32, #tpu.memory_space<vmem>>, vector<128x128xf32>
    tpu.vector_store %arg6[%c0_84, %c0_85], %70 {strides = array<i32>} : memref<128x128xf32, #tpu.memory_space<vmem>>, vector<128x128xf32>,
    %72 = vector.extract_strided_slice %55 {offsets = [2, 0, 0], sizes = [8, 16, 4], strides = [1, 1, 1]} : vector<10x16x4xf32> to vector<8x16x4xf32>
    %73 = vector.shape_cast %72 : vector<8x16x4xf32> to vector<128x4xf32>
    %c0_86 = arith.constant 0 : index
    %c0_87 = arith.constant 0 : index
    %74 = vector.load %arg6[%c0_86, %c0_87] : memref<128x128xf32, #tpu.memory_space<vmem>>, vector<128x128xf32>
    %c2_88 = arith.constant 2 : index
    %c2_89 = arith.constant 2 : index
    %c0_90 = arith.constant 0 : index
    %c0_91 = arith.constant 0 : index
    %75 = vector.load %arg3[%c2_88, %c2_89, %c0_90, %c0_91] : memref<3x3x4x128xf32, #tpu.memory_space<vmem>>, vector<1x1x4x128xf32>
    %76 = vector.shape_cast %75 : vector<1x1x4x128xf32> to vector<4x128xf32>
    %cst_92 = arith.constant dense<0.000000e+00> : vector<128x128xf32>
    %77 = tpu.matmul %73, %76, %cst_92 {dimension_numbers = #tpu.dot_dimension_numbers<[1], [0], [0], [1], [0, 0, 1, 1], [], []>} : vector<128x4xf32>, vector<4x128xf32>, vector<128x128xf32> -> vector<128x128xf32>
    %78 = arith.addf %74, %77 : vector<128x128xf32>
    %c0_93 = arith.constant 0 : index
    %c0_94 = arith.constant 0 : index
    %79 = vector.load %arg6[%c0_93, %c0_94] : memref<128x128xf32, #tpu.memory_space<vmem>>, vector<128x128xf32>
    tpu.vector_store %arg6[%c0_93, %c0_94], %78 {strides = array<i32>} : memref<128x128xf32, #tpu.memory_space<vmem>>, vector<128x128xf32>,
    %c0_95 = arith.constant 0 : index
    %c0_96 = arith.constant 0 : index
    %80 = vector.load %arg6[%c0_95, %c0_96] : memref<128x128xf32, #tpu.memory_space<vmem>>, vector<128x128xf32>
    %81 = vector.shape_cast %80 : vector<128x128xf32> to vector<8x16x128xf32>
    %c0_97 = arith.constant 0 : index
    %c0_98 = arith.constant 0 : index
    %c0_99 = arith.constant 0 : index
    %c0_100 = arith.constant 0 : index
    %c0_101 = arith.constant 0 : index
    %82 = vector.load %arg4[%c0_97, %c0_98, %c0_99, %c0_100, %c0_101] : memref<1x1x8x16x128xf32, #tpu.memory_space<vmem>>, vector<1x1x8x16x128xf32>
    %83 = vector.shape_cast %82 : vector<1x1x8x16x128xf32> to vector<8x16x128xf32>
    %84 = vector.shape_cast %81 : vector<8x16x128xf32> to vector<1x1x8x16x128xf32>
    tpu.vector_store %arg4[%c0_97, %c0_98, %c0_99, %c0_100, %c0_101], %84 {strides = array<i32>} : memref<1x1x8x16x128xf32, #tpu.memory_space<vmem>>, vector<1x1x8x16x128xf32>,
    %cst_102 = arith.constant dense<0.000000e+00> : vector<128xf32>
    %85 = vector.multi_reduction <add>, %80, %cst_102 [0] : vector<128x128xf32> to vector<128xf32>
    %86 = vector.shape_cast %85 : vector<128xf32> to vector<1x128xf32>
    %87 = arith.mulf %80, %80 : vector<128x128xf32>
    %cst_103 = arith.constant dense<0.000000e+00> : vector<128xf32>
    %88 = vector.multi_reduction <add>, %87, %cst_103 [0] : vector<128x128xf32> to vector<128xf32>
    %89 = vector.shape_cast %88 : vector<128xf32> to vector<1x128xf32>
    %cst_104 = arith.constant 0.000000e+00 : f32
    %90 = vector.broadcast %cst_104 : f32 to vector<6x128xf32>
    %91 = tpu.concatenate %86, %89, %90 in 0 : vector<1x128xf32>, vector<1x128xf32>, vector<6x128xf32> -> vector<8x128xf32>
    %c0_105 = arith.constant 0 : index
    %c0_106 = arith.constant 0 : index
    %c0_107 = arith.constant 0 : index
    %c0_108 = arith.constant 0 : index
    %92 = vector.load %arg5[%c0_105, %c0_106, %c0_107, %c0_108] : memref<1x1x8x128xf32, #tpu.memory_space<vmem>>, vector<1x1x8x128xf32>
    %93 = vector.shape_cast %92 : vector<1x1x8x128xf32> to vector<8x128xf32>
    %94 = vector.shape_cast %91 : vector<8x128xf32> to vector<1x1x8x128xf32>
    tpu.vector_store %arg5[%c0_105, %c0_106, %c0_107, %c0_108], %94 {strides = array<i32>} : memref<1x1x8x128xf32, #tpu.memory_space<vmem>>, vector<1x1x8x128xf32>,
    return
  }
  func.func @transform_0(%arg0: i32, %arg1: i32) -> (i32, i32, i32, i32, i32) {
    %c0_i32 = arith.constant 0 : i32
    %c0_i32_0 = arith.constant 0 : i32
    %c0_i32_1 = arith.constant 0 : i32
    %c0_i32_2 = arith.constant 0 : i32
    return %arg0, %arg1, %c0_i32, %c0_i32_0, %c0_i32_1 : i32, i32, i32, i32, i32
  }
  func.func @transform_1(%arg0: i32, %arg1: i32) -> (i32, i32, i32, i32) {
    %c0_i32 = arith.constant 0 : i32
    %c0_i32_0 = arith.constant 0 : i32
    %c0_i32_1 = arith.constant 0 : i32
    %c0_i32_2 = arith.constant 0 : i32
    %c0_i32_3 = arith.constant 0 : i32
    return %c0_i32, %c0_i32_0, %c0_i32_1, %c0_i32_2 : i32, i32, i32, i32
  }
  func.func @transform_2(%arg0: i32, %arg1: i32) -> (i32, i32, i32, i32, i32) {
    %c0_i32 = arith.constant 0 : i32
    %c0_i32_0 = arith.constant 0 : i32
    %c0_i32_1 = arith.constant 0 : i32
    %c0_i32_2 = arith.constant 0 : i32
    return %arg0, %arg1, %c0_i32, %c0_i32_0, %c0_i32_1 : i32, i32, i32, i32, i32
  }
  func.func @transform_3(%arg0: i32, %arg1: i32) -> (i32, i32, i32, i32) {
    %c0_i32 = arith.constant 0 : i32
    %c0_i32_0 = arith.constant 0 : i32
    %c0_i32_1 = arith.constant 0 : i32
    return %arg0, %arg1, %c0_i32, %c0_i32_0 : i32, i32, i32, i32
  }
}

</mosaic_0001>

<llo_original>
// kernel: tpu_custom_call.1
$region0: #{tpu_custom_call.1}
  #allocation0 [shape = 'u32[]', space=smem, size = 0x4, offset = 0x4, fixed_abs, tag = 'smem constant byte address 0x4 - core index']
  #allocation1 [shape = 'u32[144,128]{1,0:T(1,128)}', space=vmem, size = 0x12000, scoped, tag = 'internal scratch']
  #allocation2 [shape = 'f32[128,128]{1,0:T(8,128)}', space=vmem, size = 0x10000, scoped, tag = 'scratch operand']
  %s0 = inlined_call_operand.vmem [shape: f32[2,2,10,18,4], index: 0, kind: input, shape index: {}]
  %s1 = inlined_call_operand.vmem [shape: f32[3,3,4,128], index: 1, kind: input, shape index: {}]
  %s2 = inlined_call_operand.hbm [shape: f32[2,2,8,16,128], index: 2, kind: output, shape index: {0}]
  %s3 = inlined_call_operand.hbm [shape: f32[2,2,8,128], index: 3, kind: output, shape index: {1}]
  %4 = xla_tuple %s2, %s3
  %s5 = sld [smem:[#allocation0]]
  $region49: #{tpu_custom_call.1} parent=0
    _
  %s7 = ssub.s32 1, %s5
  %s8 = scalar_select 0, %s7, %s5
  $region1: #{tpu_custom_call.1} parent=0
    #allocation3 [shape = 'u8[131072]{0}', space=vmem, size = 0x20000, scoped, tag = 'output window, operand 0']
    #allocation4 [shape = 's32[2]{0}', space=sflag, size = 0x8, scoped, tag = 'scoped memory for tpu_custom_call.1']
    #allocation5 [shape = 'u8[8192]{0}', space=vmem, size = 0x2000, scoped, tag = 'output window, operand 1']
    #allocation6 [shape = 's32[2]{0}', space=sflag, size = 0x8, scoped, tag = 'scoped memory for tpu_custom_call.1']
    %9 = vsyncpa [#allocation4], 0
    %s10 = scalar_lea.sflag [#allocation4], 1
    %11 = vsyncpa %s10, 0
    %12 = vsyncpa [#allocation6], 0
    %s13 = scalar_lea.sflag [#allocation6], 1
    %14 = vsyncpa %s13, 0
    loop: start=0, step=1, limit=6
    $region2: #{tpu_custom_call.1} parent=1 // loop_pre_header
      _
    $region3: #{tpu_custom_call.1} parent=1 // loop_header
      %s16 = sphi 0, %s20
      %p17 = scmp.ge.s32.totalorder %s16, 6
      %s23 = sphi 0, %s35
      %s24 = sphi 0, %s31
      %s25 = sphi 0, %s23
      %s26 = sphi 0, %s24
      %s27 = sphi 0, %s25
      %s28 = sphi 0, %s26
      %s40 = sphi 0, %s42
      %s43 = sphi 0, %s40
      %s44 = sphi 0, %s43
      %s60 = sphi 0, %s44
      %s64 = sphi 0, %s64
      %s66 = sphi 0, %s64
      %s67 = sphi 0, %s66
      %s81 = sphi 0, %s67
      %s89 = sphi 0, %s91
      %s92 = sphi 0, %s89
      %s93 = sphi 0, %s92
      %s109 = sphi 0, %s93
      %s117 = sphi 0, %s119
      %s120 = sphi 0, %s117
      %s121 = sphi 0, %s120
      %s137 = sphi 0, %s121
    $region4: #{tpu_custom_call.1} parent=1 // loop_header_branch
      %19 = sbr.rel (%p17) target = $region8
    $region5: #{tpu_custom_call.1} parent=1 // loop_body
      %s21 = ssub.s32 %s16, 1
      %s22 = ssub.s32 %s16, 2
      %s29 = sadd.s32 1, %s24
      %p30 = scmp.ge.s32.totalorder %s29, 2
      %s31 = scalar_select %p30, 0, %s29
      %s32 = sadd.s32 1, %s23
      %s33 = scalar_select %p30, %s32, %s23
      %p34 = scmp.ge.s32.totalorder %s33, 2
      %s35 = scalar_select %p34, 0, %s33
      %s36 = ssub.s32 %s23, %s35
      %s37 = ssub.s32 %s24, %s31
      %s38 = sor.u32 %s36, %s37
      %p39 = scmp.eq.s32.totalorder %s38, 0
      %s41 = sadd.s32 %s40, 1
      %s42 = scalar_select %p39, %s40, %s41
      %p45 = pneg %p39
      %p46 = scmp.eq.s32.totalorder %s16, 3
      %p47 = por %p45, %p46
      %p48 = scmp.ne.s32.totalorder %s40, %s43
      %p49 = scmp.eq.s32.totalorder %s16, 0
      %p50 = por %p48, %p49
      %p51 = scmp.ne.s32.totalorder %s40, %s43
      %p52 = scmp.eq.s32.totalorder %s21, 3
      %p53 = por %p51, %p52
      %p54 = scmp.ne.s32.totalorder %s43, %s44
      %p55 = scmp.eq.s32.totalorder %s21, 0
      %p56 = por %p54, %p55
      %p57 = scmp.ne.s32.totalorder %s43, %s44
      %p58 = scmp.eq.s32.totalorder %s22, 3
      %p59 = por %p57, %p58
      %p61 = scmp.ne.s32.totalorder %s44, %s60
      %p62 = scmp.eq.s32.totalorder %s22, 0
      %p63 = por %p61, %p62
      %s65 = sadd.s32 %s64, 1
      %p68 = scmp.eq.s32.totalorder %s16, 3
      %p69 = scmp.ne.s32.totalorder %s64, %s66
      %p70 = scmp.eq.s32.totalorder %s16, 0
      %p71 = por %p69, %p70
      %p72 = scmp.ne.s32.totalorder %s64, %s66
      %p73 = scmp.eq.s32.totalorder %s21, 3
      %p74 = por %p72, %p73
      %p75 = scmp.ne.s32.totalorder %s66, %s67
      %p76 = scmp.eq.s32.totalorder %s21, 0
      %p77 = por %p75, %p76
      %p78 = scmp.ne.s32.totalorder %s66, %s67
      %p79 = scmp.eq.s32.totalorder %s22, 3
      %p80 = por %p78, %p79
      %p82 = scmp.ne.s32.totalorder %s67, %s81
      %p83 = scmp.eq.s32.totalorder %s22, 0
      %p84 = por %p82, %p83
      %s85 = ssub.s32 %s23, %s35
      %s86 = ssub.s32 %s24, %s31
      %s87 = sor.u32 %s85, %s86
      %p88 = scmp.eq.s32.totalorder %s87, 0
      %s90 = sadd.s32 %s89, 1
      %s91 = scalar_select %p88, %s89, %s90
      %p94 = pneg %p88
      %p95 = scmp.eq.s32.totalorder %s16, 3
      %p96 = por %p94, %p95
      %p97 = scmp.ne.s32.totalorder %s89, %s92
      %p98 = scmp.eq.s32.totalorder %s16, 0
      %p99 = por %p97, %p98
      %p100 = scmp.ne.s32.totalorder %s89, %s92
      %p101 = scmp.eq.s32.totalorder %s21, 3
      %p102 = por %p100, %p101
      %p103 = scmp.ne.s32.totalorder %s92, %s93
      %p104 = scmp.eq.s32.totalorder %s21, 0
      %p105 = por %p103, %p104
      %p106 = scmp.ne.s32.totalorder %s92, %s93
      %p107 = scmp.eq.s32.totalorder %s22, 3
      %p108 = por %p106, %p107
      %p110 = scmp.ne.s32.totalorder %s93, %s109
      %p111 = scmp.eq.s32.totalorder %s22, 0
      %p112 = por %p110, %p111
      %s113 = ssub.s32 %s23, %s35
      %s114 = ssub.s32 %s24, %s31
      %s115 = sor.u32 %s113, %s114
      %p116 = scmp.eq.s32.totalorder %s115, 0
      %s118 = sadd.s32 %s117, 1
      %s119 = scalar_select %p116, %s117, %s118
      %p122 = pneg %p116
      %p123 = scmp.eq.s32.totalorder %s16, 3
      %p124 = por %p122, %p123
      %p125 = scmp.ne.s32.totalorder %s117, %s120
      %p126 = scmp.eq.s32.totalorder %s16, 0
      %p127 = por %p125, %p126
      %p128 = scmp.ne.s32.totalorder %s117, %s120
      %p129 = scmp.eq.s32.totalorder %s21, 3
      %p130 = por %p128, %p129
      %p131 = scmp.ne.s32.totalorder %s120, %s121
      %p132 = scmp.eq.s32.totalorder %s21, 0
      %p133 = por %p131, %p132
      %p134 = scmp.ne.s32.totalorder %s120, %s121
      %p135 = scmp.eq.s32.totalorder %s22, 3
      %p136 = por %p134, %p135
      %p138 = scmp.ne.s32.totalorder %s121, %s137
      %p139 = scmp.eq.s32.totalorder %s22, 0
      %p140 = por %p138, %p139
      %p141 = scmp.le.s32.totalorder 1, %s16
      %p142 = scmp.lt.s32.totalorder %s16, 5
      %p143 = pnand %p141, %p142
      %p144 = pneg %p143
      // Predicated region
      $region9: #{tpu_custom_call.1} parent=5 // pred_check
        _
      $region10: #{tpu_custom_call.1} parent=5 // pred_check_branch
        %146 = sbr.rel (%p143) target = $region12
      $region11: #{tpu_custom_call.1} parent=5 // pred_region
        %s147 = ssub.s32 %s16, 1
        // Predicated region
        $region13: #{tpu_custom_call.1} parent=11 // pred_check
          %p148 = pneg %p77
        $region14: #{tpu_custom_call.1} parent=11 // pred_check_branch
          %150 = sbr.rel (%p148) target = $region16
        $region15: #{tpu_custom_call.1} parent=11 // pred_region
          _
        $region16: #{tpu_custom_call.1} parent=11 // pred_fallthru
          _
      $region12: #{tpu_custom_call.1} parent=5 // pred_fallthru
        _
      %p151 = scmp.lt.s32.totalorder %s16, 4
      // Predicated region
      $region17: #{tpu_custom_call.1} parent=5 // pred_check
        %p152 = pneg %p151
      $region18: #{tpu_custom_call.1} parent=5 // pred_check_branch
        %154 = sbr.rel (%p152) target = $region20
      $region19: #{tpu_custom_call.1} parent=5 // pred_region
        // Predicated region
        $region21: #{tpu_custom_call.1} parent=19 // pred_check
          %p155 = pneg %p50
        $region22: #{tpu_custom_call.1} parent=19 // pred_check_branch
          %157 = sbr.rel (%p155) target = $region24
        $region23: #{tpu_custom_call.1} parent=19 // pred_region
          %p158 = scmp.lt.s32.totalorder %s23, 1
          %s159 = scalar_select %p158, %s23, 1
          %p160 = scmp.lt.s32.totalorder %s24, 1
          %s161 = scalar_select %p160, %s24, 1
          %s162 = smul.addr %s161, 30
          %s163 = smul.addr %s159, 60
          %s164 = sadd.s32 %s162, %s163
          %s165 = smul.addr %s164, 8
          %s166 = scalar_lea.vmem %s0, %s165
        $region24: #{tpu_custom_call.1} parent=19 // pred_fallthru
          _
      $region20: #{tpu_custom_call.1} parent=5 // pred_fallthru
        _
      %p167 = scmp.le.s32.totalorder 1, %s16
      %p168 = scmp.lt.s32.totalorder %s16, 5
      %p169 = pnand %p167, %p168
      %p170 = pneg %p169
      // Predicated region
      $region25: #{tpu_custom_call.1} parent=5 // pred_check
        _
      $region26: #{tpu_custom_call.1} parent=5 // pred_check_branch
        %172 = sbr.rel (%p169) target = $region28
      $region27: #{tpu_custom_call.1} parent=5 // pred_region
        %s173 = ssub.s32 %s16, 1
        %p174 = scmp.lt.s32.totalorder %s25, 1
        %s175 = scalar_select %p174, %s25, 1
        %p176 = scmp.lt.s32.totalorder %s26, 1
        %s177 = scalar_select %p176, %s26, 1
        %s178 = smul.addr %s177, 30
        %s179 = smul.addr %s175, 60
        %s180 = sadd.s32 %s178, %s179
        %s181 = smul.addr %s180, 8
        %s182 = scalar_lea.vmem %s0, %s181
        %p183 = pneg %p56
        %p184 = pneg %p53
        %p185 = pneg %p77
        %p186 = pneg %p74
        %p187 = pneg %p105
        %p188 = pneg %p102
        %s189 = sand.u32 %s92, 1
        %s190 = scalar_lea.sflag [#allocation4], %s189
        %s191 = sand.u32 %s92, 1
        %s192 = smul.addr %s191, 128
        %s193 = scalar_lea.vmem [#allocation3], %s192
        %p194 = pneg %p133
        %p195 = pneg %p130
        %s196 = sand.u32 %s120, 1
        %s197 = scalar_lea.sflag [#allocation6], %s196
        %s198 = sand.u32 %s120, 1
        %s199 = smul.addr %s198, 8
        %s200 = scalar_lea.vmem [#allocation5], %s199
        %p201 = scmp.lt.s32.totalorder %s25, 1
        %s202 = scalar_select %p201, %s25, 1
        %p203 = scmp.lt.s32.totalorder %s26, 1
        %s204 = scalar_select %p203, %s26, 1
        %s205 = smul.addr %s204, 30
        %s206 = smul.addr %s202, 60
        %s207 = sadd.s32 %s205, %s206
        %s208 = smul.addr %s207, 8
        %s209 = scalar_lea.vmem %s0, %s208
        %210 = vst [vmem:[#allocation2] sm:$0xff] 0.0
        %211 = vst [vmem:[#allocation2 + $0x8] sm:$0xff] 0.0
        %212 = vst [vmem:[#allocation2 + $0x10] sm:$0xff] 0.0
        %213 = vst [vmem:[#allocation2 + $0x18] sm:$0xff] 0.0
        %214 = vst [vmem:[#allocation2 + $0x20] sm:$0xff] 0.0
        %215 = vst [vmem:[#allocation2 + $0x28] sm:$0xff] 0.0
        %216 = vst [vmem:[#allocation2 + $0x30] sm:$0xff] 0.0
        %217 = vst [vmem:[#allocation2 + $0x38] sm:$0xff] 0.0
        %218 = vst [vmem:[#allocation2 + $0x40] sm:$0xff] 0.0
        %219 = vst [vmem:[#allocation2 + $0x48] sm:$0xff] 0.0
        %220 = vst [vmem:[#allocation2 + $0x50] sm:$0xff] 0.0
        %221 = vst [vmem:[#allocation2 + $0x58] sm:$0xff] 0.0
        %222 = vst [vmem:[#allocation2 + $0x60] sm:$0xff] 0.0
        %223 = vst [vmem:[#allocation2 + $0x68] sm:$0xff] 0.0
        %224 = vst [vmem:[#allocation2 + $0x70] sm:$0xff] 0.0
        %225 = vst [vmem:[#allocation2 + $0x78] sm:$0xff] 0.0
        %v226 = vld [vmem:[%s209] sm:$0xff]
        %v227 = vld [vmem:[%s209 + $0x8] sm:$0xff]
        %v228 = vld [vmem:[%s209 + $0x18] sm:$0xff]
        %v229 = vld [vmem:[%s209 + $0x20] sm:$0xff]
        %v230 = vld [vmem:[%s209 + $0x30] sm:$0xff]
        %v231 = vld [vmem:[%s209 + $0x38] sm:$0xff]
        %v232 = vld [vmem:[%s209 + $0x48] sm:$0xff]
        %v233 = vld [vmem:[%s209 + $0x50] sm:$0xff]
        %v234 = vld [vmem:[%s209 + $0x60] sm:$0xff]
        %v235 = vld [vmem:[%s209 + $0x68] sm:$0xff]
        %v236 = vld [vmem:[%s209 + $0x78] sm:$0xff]
        %v237 = vld [vmem:[%s209 + $0x80] sm:$0xff]
        %v238 = vld [vmem:[%s209 + $0x90] sm:$0xff]
        %v239 = vld [vmem:[%s209 + $0x98] sm:$0xff]
        %v240 = vld [vmem:[%s209 + $0xa8] sm:$0xff]
        %v241 = vld [vmem:[%s209 + $0xb0] sm:$0xff]
        %v242 = vld [vmem:[%s209 + $0xc0] sm:$0xff]
        %v243 = vld [vmem:[%s209 + $0xc8] sm:$0xff]
        %v244 = vld [vmem:[%s209 + $0xd8] sm:$0xff]
        %v245 = vld [vmem:[%s209 + $0xe0] sm:$0xff]
        %v246 = vld [vmem:[#allocation2] sm:$0xff]
        %v247 = vld [vmem:[#allocation2 + $0x8] sm:$0xff]
        %v248 = vld [vmem:[#allocation2 + $0x10] sm:$0xff]
        %v249 = vld [vmem:[#allocation2 + $0x18] sm:$0xff]
        %v250 = vld [vmem:[#allocation2 + $0x20] sm:$0xff]
        %v251 = vld [vmem:[#allocation2 + $0x28] sm:$0xff]
        %v252 = vld [vmem:[#allocation2 + $0x30] sm:$0xff]
        %v253 = vld [vmem:[#allocation2 + $0x38] sm:$0xff]
        %v254 = vld [vmem:[#allocation2 + $0x40] sm:$0xff]
        %v255 = vld [vmem:[#allocation2 + $0x48] sm:$0xff]
        %v256 = vld [vmem:[#allocation2 + $0x50] sm:$0xff]
        %v257 = vld [vmem:[#allocation2 + $0x58] sm:$0xff]
        %v258 = vld [vmem:[#allocation2 + $0x60] sm:$0xff]
        %v259 = vld [vmem:[#allocation2 + $0x68] sm:$0xff]
        %v260 = vld [vmem:[#allocation2 + $0x70] sm:$0xff]
        %v261 = vld [vmem:[#allocation2 + $0x78] sm:$0xff]
        %v262 = vld [vmem:[%s1] sm:$0xf]
        %vm263 = vcmask 31744
        %v265 = vsel %vm263, %v226, 0
        %v268 = vsel %vm263, %v227, 0
        %v271 = vsel %vm263, %v228, 0
        %v274 = vsel %vm263, %v229, 0
        %v277 = vsel %vm263, %v230, 0
        %v280 = vsel %vm263, %v231, 0
        %v283 = vsel %vm263, %v232, 0
        %v286 = vsel %vm263, %v233, 0
        %v289 = vsel %vm263, %v234, 0
        %v292 = vsel %vm263, %v235, 0
        %v295 = vsel %vm263, %v236, 0
        %v298 = vsel %vm263, %v237, 0
        %v301 = vsel %vm263, %v238, 0
        %v304 = vsel %vm263, %v239, 0
        %v307 = vsel %vm263, %v240, 0
        %v310 = vsel %vm263, %v241, 0
        %vm312 = vcmask 1043456
        %v314 = vsel %vm312, %v262, 0
        %316 = vmatprep.subr.mxu0 0.0
        %317 = vmatpush1.msra.mxu0 %v314
        %318 = vmatprep.subr.mxu0 0.0
        %319 = vmatpush1.msra.mxu0 0.0
        %320 = vmatprep.subr.mxu0 0.0
        %321 = vmatpush1.msra.mxu0 0.0
        %322 = vmatprep.subr.mxu0 0.0
        %323 = vmatpush1.msra.mxu0 0.0
        %324 = vmatprep.subr.mxu0 0.0
        %325 = vmatpush1.msra.mxu0 0.0
        %326 = vmatprep.subr.mxu0 0.0
        %327 = vmatpush1.msra.mxu0 0.0
        %328 = vmatprep.subr.mxu0 0.0
        %329 = vmatpush1.msra.mxu0 0.0
        %330 = vmatprep.subr.mxu0 0.0
        %331 = vmatpush1.msra.mxu0 0.0
        %332 = vmatprep.subr.mxu0 0.0
        %333 = vmatpush1.msra.mxu0 0.0
        %334 = vmatprep.subr.mxu0 0.0
        %335 = vmatpush1.msra.mxu0 0.0
        %336 = vmatprep.subr.mxu0 0.0
        %337 = vmatpush1.msra.mxu0 0.0
        %338 = vmatprep.subr.mxu0 0.0
        %339 = vmatpush1.msra.mxu0 0.0
        %340 = vmatprep.subr.mxu0 0.0
        %341 = vmatpush1.msra.mxu0 0.0
        %342 = vmatprep.subr.mxu0 0.0
        %343 = vmatpush1.msra.mxu0 0.0
        %344 = vmatprep.subr.mxu0 0.0
        %345 = vmatpush1.msra.mxu0 0.0
        %346 = vmatprep.subr.mxu0 0.0
        %347 = vmatpush1.msra.mxu0 0.0
        %348 = vmatprep.subr.mxu0 0.0
        %349 = vmatpush1.msra.mxu0 0.0
        %350 = vmatprep.subr.mxu0 0.0
        %351 = vmatpush1.msra.mxu0 0.0
        %352 = vmatprep.subr.mxu0 0.0
        %353 = vmatpush1.msra.mxu0 0.0
        %354 = vmatprep.subr.mxu0 0.0
        %355 = vmatpush1.msra.mxu0 0.0
        %356 = vmatprep.subr.mxu0 0.0
        %357 = vmatpush1.msra.mxu0 0.0
        %358 = vmatprep.subr.mxu0 0.0
        %359 = vmatpush1.msra.mxu0 0.0
        %360 = vmatprep.subr.mxu0 0.0
        %361 = vmatpush1.msra.mxu0 0.0
        %362 = vmatprep.subr.mxu0 0.0
        %363 = vmatpush1.msra.mxu0 0.0
        %364 = vmatprep.subr.mxu0 0.0
        %365 = vmatpush1.msra.mxu0 0.0
        %366 = vmatprep.subr.mxu0 0.0
        %367 = vmatpush1.msra.mxu0 0.0
        %368 = vmatprep.subr.mxu0 0.0
        %369 = vmatpush1.msra.mxu0 0.0
        %370 = vmatprep.subr.mxu0 0.0
        %371 = vmatpush1.msra.mxu0 0.0
        %372 = vmatprep.subr.mxu0 0.0
        %373 = vmatpush1.msra.mxu0 0.0
        %374 = vmatprep.subr.mxu0 0.0
        %375 = vmatpush1.msra.mxu0 0.0
        %376 = vmatprep.subr.mxu0 0.0
        %377 = vmatpush1.msra.mxu0 0.0
        %378 = vmatprep.subr.mxu0 0.0
        %379 = vmatpush1.msra.mxu0 0.0
        %380 = vmatprep.mubr.f32.mxu0 0.0
        %381 = vmatmul.mubr.f32.gmra.mrb[0].mxu0 %v265
        %v382 = vpop.f32.mrb[0].mxu0
        %v383 = vadd.f32 0.0, %v382
        %v384 = vpop.f32.mrb[0].mxu0
        %385 = vmatprep.mubr.f32.mxu0 0.0
        %386 = vmatmul.mubr.f32.gmra.mrb[0].mxu0 %v268
        %v387 = vpop.f32.mrb[0].mxu0
        %v388 = vadd.f32 0.0, %v387
        %v389 = vpop.f32.mrb[0].mxu0
        %390 = vmatprep.mubr.f32.mxu0 0.0
        %391 = vmatmul.mubr.f32.gmra.mrb[0].mxu0 %v271
        %v392 = vpop.f32.mrb[0].mxu0
        %v393 = vadd.f32 0.0, %v392
        %v394 = vpop.f32.mrb[0].mxu0
        %395 = vmatprep.mubr.f32.mxu0 0.0
        %396 = vmatmul.mubr.f32.gmra.mrb[0].mxu0 %v274
        %v397 = vpop.f32.mrb[0].mxu0
        %v398 = vadd.f32 0.0, %v397
        %v399 = vpop.f32.mrb[0].mxu0
        %400 = vmatprep.mubr.f32.mxu0 0.0
        %401 = vmatmul.mubr.f32.gmra.mrb[0].mxu0 %v277
        %v402 = vpop.f32.mrb[0].mxu0
        %v403 = vadd.f32 0.0, %v402
        %v404 = vpop.f32.mrb[0].mxu0
        %405 = vmatprep.mubr.f32.mxu0 0.0
        %406 = vmatmul.mubr.f32.gmra.mrb[0].mxu0 %v280
        %v407 = vpop.f32.mrb[0].mxu0
        %v408 = vadd.f32 0.0, %v407
        %v409 = vpop.f32.mrb[0].mxu0
        %410 = vmatprep.mubr.f32.mxu0 0.0
        %411 = vmatmul.mubr.f32.gmra.mrb[0].mxu0 %v283
        %v412 = vpop.f32.mrb[0].mxu0
        %v413 = vadd.f32 0.0, %v412
        %v414 = vpop.f32.mrb[0].mxu0
        %415 = vmatprep.mubr.f32.mxu0 0.0
        %416 = vmatmul.mubr.f32.gmra.mrb[0].mxu0 %v286
        %v417 = vpop.f32.mrb[0].mxu0
        %v418 = vadd.f32 0.0, %v417
        %v419 = vpop.f32.mrb[0].mxu0
        %420 = vmatprep.mubr.f32.mxu0 0.0
        %421 = vmatmul.mubr.f32.gmra.mrb[0].mxu0 %v289
        %v422 = vpop.f32.mrb[0].mxu0
        %v423 = vadd.f32 0.0, %v422
        %v424 = vpop.f32.mrb[0].mxu0
        %425 = vmatprep.mubr.f32.mxu0 0.0
        %426 = vmatmul.mubr.f32.gmra.mrb[0].mxu0 %v292
        %v427 = vpop.f32.mrb[0].mxu0
        %v428 = vadd.f32 0.0, %v427
        %v429 = vpop.f32.mrb[0].mxu0
        %430 = vmatprep.mubr.f32.mxu0 0.0
        %431 = vmatmul.mubr.f32.gmra.mrb[0].mxu0 %v295
        %v432 = vpop.f32.mrb[0].mxu0
        %v433 = vadd.f32 0.0, %v432
        %v434 = vpop.f32.mrb[0].mxu0
        %435 = vmatprep.mubr.f32.mxu0 0.0
        %436 = vmatmul.mubr.f32.gmra.mrb[0].mxu0 %v298
        %v437 = vpop.f32.mrb[0].mxu0
        %v438 = vadd.f32 0.0, %v437
        %v439 = vpop.f32.mrb[0].mxu0
        %440 = vmatprep.mubr.f32.mxu0 0.0
        %441 = vmatmul.mubr.f32.gmra.mrb[0].mxu0 %v301
        %v442 = vpop.f32.mrb[0].mxu0
        %v443 = vadd.f32 0.0, %v442
        %v444 = vpop.f32.mrb[0].mxu0
        %445 = vmatprep.mubr.f32.mxu0 0.0
        %446 = vmatmul.mubr.f32.gmra.mrb[0].mxu0 %v304
        %v447 = vpop.f32.mrb[0].mxu0
        %v448 = vadd.f32 0.0, %v447
        %v449 = vpop.f32.mrb[0].mxu0
        %450 = vmatprep.mubr.f32.mxu0 0.0
        %451 = vmatmul.mubr.f32.gmra.mrb[0].mxu0 %v307
        %v452 = vpop.f32.mrb[0].mxu0
        %v453 = vadd.f32 0.0, %v452
        %v454 = vpop.f32.mrb[0].mxu0
        %455 = vmatprep.mubr.f32.mxu0 0.0
        %456 = vmatmul.mubr.f32.gmra.mrb[0].mxu0 %v310
        %v457 = vpop.f32.mrb[0].mxu0
        %v458 = vadd.f32 0.0, %v457
        %v459 = vpop.f32.mrb[0].mxu0
        %460 = vdwg.mxu0
        %v461 = vadd.f32 %v246, %v383
        %v462 = vadd.f32 %v247, %v388
        %v463 = vadd.f32 %v248, %v393
        %v464 = vadd.f32 %v249, %v398
        %v465 = vadd.f32 %v250, %v403
        %v466 = vadd.f32 %v251, %v408
        %v467 = vadd.f32 %v252, %v413
        %v468 = vadd.f32 %v253, %v418
        %v469 = vadd.f32 %v254, %v423
        %v470 = vadd.f32 %v255, %v428
        %v471 = vadd.f32 %v256, %v433
        %v472 = vadd.f32 %v257, %v438
        %v473 = vadd.f32 %v258, %v443
        %v474 = vadd.f32 %v259, %v448
        %v475 = vadd.f32 %v260, %v453
        %v476 = vadd.f32 %v261, %v458
        %477 = vst [vmem:[#allocation2] sm:$0xff] %v461
        %478 = vst [vmem:[#allocation2 + $0x8] sm:$0xff] %v462
        %479 = vst [vmem:[#allocation2 + $0x10] sm:$0xff] %v463
        %480 = vst [vmem:[#allocation2 + $0x18] sm:$0xff] %v464
        %481 = vst [vmem:[#allocation2 + $0x20] sm:$0xff] %v465
        %482 = vst [vmem:[#allocation2 + $0x28] sm:$0xff] %v466
        %483 = vst [vmem:[#allocation2 + $0x30] sm:$0xff] %v467
        %484 = vst [vmem:[#allocation2 + $0x38] sm:$0xff] %v468
        %485 = vst [vmem:[#allocation2 + $0x40] sm:$0xff] %v469
        %486 = vst [vmem:[#allocation2 + $0x48] sm:$0xff] %v470
        %487 = vst [vmem:[#allocation2 + $0x50] sm:$0xff] %v471
        %488 = vst [vmem:[#allocation2 + $0x58] sm:$0xff] %v472
        %489 = vst [vmem:[#allocation2 + $0x60] sm:$0xff] %v473
        %490 = vst [vmem:[#allocation2 + $0x68] sm:$0xff] %v474
        %491 = vst [vmem:[#allocation2 + $0x70] sm:$0xff] %v475
        %492 = vst [vmem:[#allocation2 + $0x78] sm:$0xff] %v476
        %v493 = vld [vmem:[#allocation2] sm:$0xff]
        %v494 = vld [vmem:[#allocation2 + $0x8] sm:$0xff]
        %v495 = vld [vmem:[#allocation2 + $0x10] sm:$0xff]
        %v496 = vld [vmem:[#allocation2 + $0x18] sm:$0xff]
        %v497 = vld [vmem:[#allocation2 + $0x20] sm:$0xff]
        %v498 = vld [vmem:[#allocation2 + $0x28] sm:$0xff]
        %v499 = vld [vmem:[#allocation2 + $0x30] sm:$0xff]
        %v500 = vld [vmem:[#allocation2 + $0x38] sm:$0xff]
        %v501 = vld [vmem:[#allocation2 + $0x40] sm:$0xff]
        %v502 = vld [vmem:[#allocation2 + $0x48] sm:$0xff]
        %v503 = vld [vmem:[#allocation2 + $0x50] sm:$0xff]
        %v504 = vld [vmem:[#allocation2 + $0x58] sm:$0xff]
        %v505 = vld [vmem:[#allocation2 + $0x60] sm:$0xff]
        %v506 = vld [vmem:[#allocation2 + $0x68] sm:$0xff]
        %v507 = vld [vmem:[#allocation2 + $0x70] sm:$0xff]
        %v508 = vld [vmem:[#allocation2 + $0x78] sm:$0xff]
        %s509 = scalar_lea.vmem %s1, 12
        %v510 = vld [vmem:[%s509] sm:$0xf]
        %v512 = vsel %vm263, %v242, 0
        %v515 = vsel %vm263, %v243, 0
        %v518 = vsel %vm312, %v510, 0
        %520 = vmatprep.subr.mxu0 0.0
        %521 = vmatpush1.msra.mxu0 %v518
        %522 = vmatprep.subr.mxu0 0.0
        %523 = vmatpush1.msra.mxu0 0.0
        %524 = vmatprep.subr.mxu0 0.0
        %525 = vmatpush1.msra.mxu0 0.0
        %526 = vmatprep.subr.mxu0 0.0
        %527 = vmatpush1.msra.mxu0 0.0
        %528 = vmatprep.subr.mxu0 0.0
        %529 = vmatpush1.msra.mxu0 0.0
        %530 = vmatprep.subr.mxu0 0.0
        %531 = vmatpush1.msra.mxu0 0.0
        %532 = vmatprep.subr.mxu0 0.0
        %533 = vmatpush1.msra.mxu0 0.0
        %534 = vmatprep.subr.mxu0 0.0
        %535 = vmatpush1.msra.mxu0 0.0
        %536 = vmatprep.subr.mxu0 0.0
        %537 = vmatpush1.msra.mxu0 0.0
        %538 = vmatprep.subr.mxu0 0.0
        %539 = vmatpush1.msra.mxu0 0.0
        %540 = vmatprep.subr.mxu0 0.0
        %541 = vmatpush1.msra.mxu0 0.0
        %542 = vmatprep.subr.mxu0 0.0
        %543 = vmatpush1.msra.mxu0 0.0
        %544 = vmatprep.subr.mxu0 0.0
        %545 = vmatpush1.msra.mxu0 0.0
        %546 = vmatprep.subr.mxu0 0.0
        %547 = vmatpush1.msra.mxu0 0.0
        %548 = vmatprep.subr.mxu0 0.0
        %549 = vmatpush1.msra.mxu0 0.0
        %550 = vmatprep.subr.mxu0 0.0
        %551 = vmatpush1.msra.mxu0 0.0
        %552 = vmatprep.subr.mxu0 0.0
        %553 = vmatpush1.msra.mxu0 0.0
        %554 = vmatprep.subr.mxu0 0.0
        %555 = vmatpush1.msra.mxu0 0.0
        %556 = vmatprep.subr.mxu0 0.0
        %557 = vmatpush1.msra.mxu0 0.0
        %558 = vmatprep.subr.mxu0 0.0
        %559 = vmatpush1.msra.mxu0 0.0
        %560 = vmatprep.subr.mxu0 0.0
        %561 = vmatpush1.msra.mxu0 0.0
        %562 = vmatprep.subr.mxu0 0.0
        %563 = vmatpush1.msra.mxu0 0.0
        %564 = vmatprep.subr.mxu0 0.0
        %565 = vmatpush1.msra.mxu0 0.0
        %566 = vmatprep.subr.mxu0 0.0
        %567 = vmatpush1.msra.mxu0 0.0
        %568 = vmatprep.subr.mxu0 0.0
        %569 = vmatpush1.msra.mxu0 0.0
        %570 = vmatprep.subr.mxu0 0.0
        %571 = vmatpush1.msra.mxu0 0.0
        %572 = vmatprep.subr.mxu0 0.0
        %573 = vmatpush1.msra.mxu0 0.0
        %574 = vmatprep.subr.mxu0 0.0
        %575 = vmatpush1.msra.mxu0 0.0
        %576 = vmatprep.subr.mxu0 0.0
        %577 = vmatpush1.msra.mxu0 0.0
        %578 = vmatprep.subr.mxu0 0.0
        %579 = vmatpush1.msra.mxu0 0.0
        %580 = vmatprep.subr.mxu0 0.0
        %581 = vmatpush1.msra.mxu0 0.0
        %582 = vmatprep.subr.mxu0 0.0
        %583 = vmatpush1.msra.mxu0 0.0
        %584 = vmatprep.mubr.f32.mxu0 0.0
        %585 = vmatmul.mubr.f32.gmra.mrb[0].mxu0 %v271
        %v586 = vpop.f32.mrb[0].mxu0
        %v587 = vadd.f32 0.0, %v586
        %v588 = vpop.f32.mrb[0].mxu0
        %589 = vmatprep.mubr.f32.mxu0 0.0
        %590 = vmatmul.mubr.f32.gmra.mrb[0].mxu0 %v274
        %v591 = vpop.f32.mrb[0].mxu0
        %v592 = vadd.f32 0.0, %v591
        %v593 = vpop.f32.mrb[0].mxu0
        %594 = vmatprep.mubr.f32.mxu0 0.0
        %595 = vmatmul.mubr.f32.gmra.mrb[0].mxu0 %v277
        %v596 = vpop.f32.mrb[0].mxu0
        %v597 = vadd.f32 0.0, %v596
        %v598 = vpop.f32.mrb[0].mxu0
        %599 = vmatprep.mubr.f32.mxu0 0.0
        %600 = vmatmul.mubr.f32.gmra.mrb[0].mxu0 %v280
        %v601 = vpop.f32.mrb[0].mxu0
        %v602 = vadd.f32 0.0, %v601
        %v603 = vpop.f32.mrb[0].mxu0
        %604 = vmatprep.mubr.f32.mxu0 0.0
        %605 = vmatmul.mubr.f32.gmra.mrb[0].mxu0 %v283
        %v606 = vpop.f32.mrb[0].mxu0
        %v607 = vadd.f32 0.0, %v606
        %v608 = vpop.f32.mrb[0].mxu0
        %609 = vmatprep.mubr.f32.mxu0 0.0
        %610 = vmatmul.mubr.f32.gmra.mrb[0].mxu0 %v286
        %v611 = vpop.f32.mrb[0].mxu0
        %v612 = vadd.f32 0.0, %v611
        %v613 = vpop.f32.mrb[0].mxu0
        %614 = vmatprep.mubr.f32.mxu0 0.0
        %615 = vmatmul.mubr.f32.gmra.mrb[0].mxu0 %v289
        %v616 = vpop.f32.mrb[0].mxu0
        %v617 = vadd.f32 0.0, %v616
        %v618 = vpop.f32.mrb[0].mxu0
        %619 = vmatprep.mubr.f32.mxu0 0.0
        %620 = vmatmul.mubr.f32.gmra.mrb[0].mxu0 %v292
        %v621 = vpop.f32.mrb[0].mxu0
        %v622 = vadd.f32 0.0, %v621
        %v623 = vpop.f32.mrb[0].mxu0
        %624 = vmatprep.mubr.f32.mxu0 0.0
        %625 = vmatmul.mubr.f32.gmra.mrb[0].mxu0 %v295
        %v626 = vpop.f32.mrb[0].mxu0
        %v627 = vadd.f32 0.0, %v626
        %v628 = vpop.f32.mrb[0].mxu0
        %629 = vmatprep.mubr.f32.mxu0 0.0
        %630 = vmatmul.mubr.f32.gmra.mrb[0].mxu0 %v298
        %v631 = vpop.f32.mrb[0].mxu0
        %v632 = vadd.f32 0.0, %v631
        %v633 = vpop.f32.mrb[0].mxu0
        %634 = vmatprep.mubr.f32.mxu0 0.0
        %635 = vmatmul.mubr.f32.gmra.mrb[0].mxu0 %v301
        %v636 = vpop.f32.mrb[0].mxu0
        %v637 = vadd.f32 0.0, %v636
        %v638 = vpop.f32.mrb[0].mxu0
        %639 = vmatprep.mubr.f32.mxu0 0.0
        %640 = vmatmul.mubr.f32.gmra.mrb[0].mxu0 %v304
        %v641 = vpop.f32.mrb[0].mxu0
        %v642 = vadd.f32 0.0, %v641
        %v643 = vpop.f32.mrb[0].mxu0
        %644 = vmatprep.mubr.f32.mxu0 0.0
        %645 = vmatmul.mubr.f32.gmra.mrb[0].mxu0 %v307
        %v646 = vpop.f32.mrb[0].mxu0
        %v647 = vadd.f32 0.0, %v646
        %v648 = vpop.f32.mrb[0].mxu0
        %649 = vmatprep.mubr.f32.mxu0 0.0
        %650 = vmatmul.mubr.f32.gmra.mrb[0].mxu0 %v310
        %v651 = vpop.f32.mrb[0].mxu0
        %v652 = vadd.f32 0.0, %v651
        %v653 = vpop.f32.mrb[0].mxu0
        %654 = vmatprep.mubr.f32.mxu0 0.0
        %655 = vmatmul.mubr.f32.gmra.mrb[0].mxu0 %v512
        %v656 = vpop.f32.mrb[0].mxu0
        %v657 = vadd.f32 0.0, %v656
        %v658 = vpop.f32.mrb[0].mxu0
        %659 = vmatprep.mubr.f32.mxu0 0.0
        %660 = vmatmul.mubr.f32.gmra.mrb[0].mxu0 %v515
        %v661 = vpop.f32.mrb[0].mxu0
        %v662 = vadd.f32 0.0, %v661
        %v663 = vpop.f32.mrb[0].mxu0
        %664 = vdwg.mxu0
        %v665 = vadd.f32 %v493, %v587
        %v666 = vadd.f32 %v494, %v592
        %v667 = vadd.f32 %v495, %v597
        %v668 = vadd.f32 %v496, %v602
        %v669 = vadd.f32 %v497, %v607
        %v670 = vadd.f32 %v498, %v612
        %v671 = vadd.f32 %v499, %v617
        %v672 = vadd.f32 %v500, %v622
        %v673 = vadd.f32 %v501, %v627
        %v674 = vadd.f32 %v502, %v632
        %v675 = vadd.f32 %v503, %v637
        %v676 = vadd.f32 %v504, %v642
        %v677 = vadd.f32 %v505, %v647
        %v678 = vadd.f32 %v506, %v652
        %v679 = vadd.f32 %v507, %v657
        %v680 = vadd.f32 %v508, %v662
        %681 = vst [vmem:[#allocation2] sm:$0xff] %v665
        %682 = vst [vmem:[#allocation2 + $0x8] sm:$0xff] %v666
        %683 = vst [vmem:[#allocation2 + $0x10] sm:$0xff] %v667
        %684 = vst [vmem:[#allocation2 + $0x18] sm:$0xff] %v668
        %685 = vst [vmem:[#allocation2 + $0x20] sm:$0xff] %v669
        %686 = vst [vmem:[#allocation2 + $0x28] sm:$0xff] %v670
        %687 = vst [vmem:[#allocation2 + $0x30] sm:$0xff] %v671
        %688 = vst [vmem:[#allocation2 + $0x38] sm:$0xff] %v672
        %689 = vst [vmem:[#allocation2 + $0x40] sm:$0xff] %v673
        %690 = vst [vmem:[#allocation2 + $0x48] sm:$0xff] %v674
        %691 = vst [vmem:[#allocation2 + $0x50] sm:$0xff] %v675
        %692 = vst [vmem:[#allocation2 + $0x58] sm:$0xff] %v676
        %693 = vst [vmem:[#allocation2 + $0x60] sm:$0xff] %v677
        %694 = vst [vmem:[#allocation2 + $0x68] sm:$0xff] %v678
        %695 = vst [vmem:[#allocation2 + $0x70] sm:$0xff] %v679
        %696 = vst [vmem:[#allocation2 + $0x78] sm:$0xff] %v680
        %v697 = vld [vmem:[#allocation2] sm:$0xff]
        %v698 = vld [vmem:[#allocation2 + $0x8] sm:$0xff]
        %v699 = vld [vmem:[#allocation2 + $0x10] sm:$0xff]
        %v700 = vld [vmem:[#allocation2 + $0x18] sm:$0xff]
        %v701 = vld [vmem:[#allocation2 + $0x20] sm:$0xff]
        %v702 = vld [vmem:[#allocation2 + $0x28] sm:$0xff]
        %v703 = vld [vmem:[#allocation2 + $0x30] sm:$0xff]
        %v704 = vld [vmem:[#allocation2 + $0x38] sm:$0xff]
        %v705 = vld [vmem:[#allocation2 + $0x40] sm:$0xff]
        %v706 = vld [vmem:[#allocation2 + $0x48] sm:$0xff]
        %v707 = vld [vmem:[#allocation2 + $0x50] sm:$0xff]
        %v708 = vld [vmem:[#allocation2 + $0x58] sm:$0xff]
        %v709 = vld [vmem:[#allocation2 + $0x60] sm:$0xff]
        %v710 = vld [vmem:[#allocation2 + $0x68] sm:$0xff]
        %v711 = vld [vmem:[#allocation2 + $0x70] sm:$0xff]
        %v712 = vld [vmem:[#allocation2 + $0x78] sm:$0xff]
        %s713 = scalar_lea.vmem %s1, 24
        %v714 = vld [vmem:[%s713] sm:$0xf]
        %v716 = vsel %vm263, %v244, 0
        %v719 = vsel %vm263, %v245, 0
        %v722 = vsel %vm312, %v714, 0
        %724 = vmatprep.subr.mxu0 0.0
        %725 = vmatpush1.msra.mxu0 %v722
        %726 = vmatprep.subr.mxu0 0.0
        %727 = vmatpush1.msra.mxu0 0.0
        %728 = vmatprep.subr.mxu0 0.0
        %729 = vmatpush1.msra.mxu0 0.0
        %730 = vmatprep.subr.mxu0 0.0
        %731 = vmatpush1.msra.mxu0 0.0
        %732 = vmatprep.subr.mxu0 0.0
        %733 = vmatpush1.msra.mxu0 0.0
        %734 = vmatprep.subr.mxu0 0.0
        %735 = vmatpush1.msra.mxu0 0.0
        %736 = vmatprep.subr.mxu0 0.0
        %737 = vmatpush1.msra.mxu0 0.0
        %738 = vmatprep.subr.mxu0 0.0
        %739 = vmatpush1.msra.mxu0 0.0
        %740 = vmatprep.subr.mxu0 0.0
        %741 = vmatpush1.msra.mxu0 0.0
        %742 = vmatprep.subr.mxu0 0.0
        %743 = vmatpush1.msra.mxu0 0.0
        %744 = vmatprep.subr.mxu0 0.0
        %745 = vmatpush1.msra.mxu0 0.0
        %746 = vmatprep.subr.mxu0 0.0
        %747 = vmatpush1.msra.mxu0 0.0
        %748 = vmatprep.subr.mxu0 0.0
        %749 = vmatpush1.msra.mxu0 0.0
        %750 = vmatprep.subr.mxu0 0.0
        %751 = vmatpush1.msra.mxu0 0.0
        %752 = vmatprep.subr.mxu0 0.0
        %753 = vmatpush1.msra.mxu0 0.0
        %754 = vmatprep.subr.mxu0 0.0
        %755 = vmatpush1.msra.mxu0 0.0
        %756 = vmatprep.subr.mxu0 0.0
        %757 = vmatpush1.msra.mxu0 0.0
        %758 = vmatprep.subr.mxu0 0.0
        %759 = vmatpush1.msra.mxu0 0.0
        %760 = vmatprep.subr.mxu0 0.0
        %761 = vmatpush1.msra.mxu0 0.0
        %762 = vmatprep.subr.mxu0 0.0
        %763 = vmatpush1.msra.mxu0 0.0
        %764 = vmatprep.subr.mxu0 0.0
        %765 = vmatpush1.msra.mxu0 0.0
        %766 = vmatprep.subr.mxu0 0.0
        %767 = vmatpush1.msra.mxu0 0.0
        %768 = vmatprep.subr.mxu0 0.0
        %769 = vmatpush1.msra.mxu0 0.0
        %770 = vmatprep.subr.mxu0 0.0
        %771 = vmatpush1.msra.mxu0 0.0
        %772 = vmatprep.subr.mxu0 0.0
        %773 = vmatpush1.msra.mxu0 0.0
        %774 = vmatprep.subr.mxu0 0.0
        %775 = vmatpush1.msra.mxu0 0.0
        %776 = vmatprep.subr.mxu0 0.0
        %777 = vmatpush1.msra.mxu0 0.0
        %778 = vmatprep.subr.mxu0 0.0
        %779 = vmatpush1.msra.mxu0 0.0
        %780 = vmatprep.subr.mxu0 0.0
        %781 = vmatpush1.msra.mxu0 0.0
        %782 = vmatprep.subr.mxu0 0.0
        %783 = vmatpush1.msra.mxu0 0.0
        %784 = vmatprep.subr.mxu0 0.0
        %785 = vmatpush1.msra.mxu0 0.0
        %786 = vmatprep.subr.mxu0 0.0
        %787 = vmatpush1.msra.mxu0 0.0
        %788 = vmatprep.mubr.f32.mxu0 0.0
        %789 = vmatmul.mubr.f32.gmra.mrb[0].mxu0 %v277
        %v790 = vpop.f32.mrb[0].mxu0
        %v791 = vadd.f32 0.0, %v790
        %v792 = vpop.f32.mrb[0].mxu0
        %793 = vmatprep.mubr.f32.mxu0 0.0
        %794 = vmatmul.mubr.f32.gmra.mrb[0].mxu0 %v280
        %v795 = vpop.f32.mrb[0].mxu0
        %v796 = vadd.f32 0.0, %v795
        %v797 = vpop.f32.mrb[0].mxu0
        %798 = vmatprep.mubr.f32.mxu0 0.0
        %799 = vmatmul.mubr.f32.gmra.mrb[0].mxu0 %v283
        %v800 = vpop.f32.mrb[0].mxu0
        %v801 = vadd.f32 0.0, %v800
        %v802 = vpop.f32.mrb[0].mxu0
        %803 = vmatprep.mubr.f32.mxu0 0.0
        %804 = vmatmul.mubr.f32.gmra.mrb[0].mxu0 %v286
        %v805 = vpop.f32.mrb[0].mxu0
        %v806 = vadd.f32 0.0, %v805
        %v807 = vpop.f32.mrb[0].mxu0
        %808 = vmatprep.mubr.f32.mxu0 0.0
        %809 = vmatmul.mubr.f32.gmra.mrb[0].mxu0 %v289
        %v810 = vpop.f32.mrb[0].mxu0
        %v811 = vadd.f32 0.0, %v810
        %v812 = vpop.f32.mrb[0].mxu0
        %813 = vmatprep.mubr.f32.mxu0 0.0
        %814 = vmatmul.mubr.f32.gmra.mrb[0].mxu0 %v292
        %v815 = vpop.f32.mrb[0].mxu0
        %v816 = vadd.f32 0.0, %v815
        %v817 = vpop.f32.mrb[0].mxu0
        %818 = vmatprep.mubr.f32.mxu0 0.0
        %819 = vmatmul.mubr.f32.gmra.mrb[0].mxu0 %v295
        %v820 = vpop.f32.mrb[0].mxu0
        %v821 = vadd.f32 0.0, %v820
        %v822 = vpop.f32.mrb[0].mxu0
        %823 = vmatprep.mubr.f32.mxu0 0.0
        %824 = vmatmul.mubr.f32.gmra.mrb[0].mxu0 %v298
        %v825 = vpop.f32.mrb[0].mxu0
        %v826 = vadd.f32 0.0, %v825
        %v827 = vpop.f32.mrb[0].mxu0
        %828 = vmatprep.mubr.f32.mxu0 0.0
        %829 = vmatmul.mubr.f32.gmra.mrb[0].mxu0 %v301
        %v830 = vpop.f32.mrb[0].mxu0
        %v831 = vadd.f32 0.0, %v830
        %v832 = vpop.f32.mrb[0].mxu0
        %833 = vmatprep.mubr.f32.mxu0 0.0
        %834 = vmatmul.mubr.f32.gmra.mrb[0].mxu0 %v304
        %v835 = vpop.f32.mrb[0].mxu0
        %v836 = vadd.f32 0.0, %v835
        %v837 = vpop.f32.mrb[0].mxu0
        %838 = vmatprep.mubr.f32.mxu0 0.0
        %839 = vmatmul.mubr.f32.gmra.mrb[0].mxu0 %v307
        %v840 = vpop.f32.mrb[0].mxu0
        %v841 = vadd.f32 0.0, %v840
        %v842 = vpop.f32.mrb[0].mxu0
        %843 = vmatprep.mubr.f32.mxu0 0.0
        %844 = vmatmul.mubr.f32.gmra.mrb[0].mxu0 %v310
        %v845 = vpop.f32.mrb[0].mxu0
        %v846 = vadd.f32 0.0, %v845
        %v847 = vpop.f32.mrb[0].mxu0
        %848 = vmatprep.mubr.f32.mxu0 0.0
        %849 = vmatmul.mubr.f32.gmra.mrb[0].mxu0 %v512
        %v850 = vpop.f32.mrb[0].mxu0
        %v851 = vadd.f32 0.0, %v850
        %v852 = vpop.f32.mrb[0].mxu0
        %853 = vmatprep.mubr.f32.mxu0 0.0
        %854 = vmatmul.mubr.f32.gmra.mrb[0].mxu0 %v515
        %v855 = vpop.f32.mrb[0].mxu0
        %v856 = vadd.f32 0.0, %v855
        %v857 = vpop.f32.mrb[0].mxu0
        %858 = vmatprep.mubr.f32.mxu0 0.0
        %859 = vmatmul.mubr.f32.gmra.mrb[0].mxu0 %v716
        %v860 = vpop.f32.mrb[0].mxu0
        %v861 = vadd.f32 0.0, %v860
        %v862 = vpop.f32.mrb[0].mxu0
        %863 = vmatprep.mubr.f32.mxu0 0.0
        %864 = vmatmul.mubr.f32.gmra.mrb[0].mxu0 %v719
        %v865 = vpop.f32.mrb[0].mxu0
        %v866 = vadd.f32 0.0, %v865
        %v867 = vpop.f32.mrb[0].mxu0
        %868 = vdwg.mxu0
        %v869 = vadd.f32 %v697, %v791
        %v870 = vadd.f32 %v698, %v796
        %v871 = vadd.f32 %v699, %v801
        %v872 = vadd.f32 %v700, %v806
        %v873 = vadd.f32 %v701, %v811
        %v874 = vadd.f32 %v702, %v816
        %v875 = vadd.f32 %v703, %v821
        %v876 = vadd.f32 %v704, %v826
        %v877 = vadd.f32 %v705, %v831
        %v878 = vadd.f32 %v706, %v836
        %v879 = vadd.f32 %v707, %v841
        %v880 = vadd.f32 %v708, %v846
        %v881 = vadd.f32 %v709, %v851
        %v882 = vadd.f32 %v710, %v856
        %v883 = vadd.f32 %v711, %v861
        %v884 = vadd.f32 %v712, %v866
        %885 = vst [vmem:[#allocation2] sm:$0xff] %v869
        %886 = vst [vmem:[#allocation2 + $0x8] sm:$0xff] %v870
        %887 = vst [vmem:[#allocation2 + $0x10] sm:$0xff] %v871
        %888 = vst [vmem:[#allocation2 + $0x18] sm:$0xff] %v872
        %889 = vst [vmem:[#allocation2 + $0x20] sm:$0xff] %v873
        %890 = vst [vmem:[#allocation2 + $0x28] sm:$0xff] %v874
        %891 = vst [vmem:[#allocation2 + $0x30] sm:$0xff] %v875
        %892 = vst [vmem:[#allocation2 + $0x38] sm:$0xff] %v876
        %893 = vst [vmem:[#allocation2 + $0x40] sm:$0xff] %v877
        %894 = vst [vmem:[#allocation2 + $0x48] sm:$0xff] %v878
        %895 = vst [vmem:[#allocation2 + $0x50] sm:$0xff] %v879
        %896 = vst [vmem:[#allocation2 + $0x58] sm:$0xff] %v880
        %897 = vst [vmem:[#allocation2 + $0x60] sm:$0xff] %v881
        %898 = vst [vmem:[#allocation2 + $0x68] sm:$0xff] %v882
        %899 = vst [vmem:[#allocation2 + $0x70] sm:$0xff] %v883
        %900 = vst [vmem:[#allocation2 + $0x78] sm:$0xff] %v884
        %v901 = vld [vmem:[%s209 + $0x1] sm:$0xff]
        %v902 = vld [vmem:[%s209 + $0x9] sm:$0xff]
        %v903 = vld [vmem:[%s209 + $0x19] sm:$0xff]
        %v904 = vld [vmem:[%s209 + $0x21] sm:$0xff]
        %v905 = vld [vmem:[%s209 + $0x31] sm:$0xff]
        %v906 = vld [vmem:[%s209 + $0x39] sm:$0xff]
        %v907 = vld [vmem:[%s209 + $0x49] sm:$0xff]
        %v908 = vld [vmem:[%s209 + $0x51] sm:$0xff]
        %v909 = vld [vmem:[%s209 + $0x61] sm:$0xff]
        %v910 = vld [vmem:[%s209 + $0x69] sm:$0xff]
        %v911 = vld [vmem:[%s209 + $0x79] sm:$0xff]
        %v912 = vld [vmem:[%s209 + $0x81] sm:$0xff]
        %v913 = vld [vmem:[%s209 + $0x91] sm:$0xff]
        %v914 = vld [vmem:[%s209 + $0x99] sm:$0xff]
        %v915 = vld [vmem:[%s209 + $0xa9] sm:$0xff]
        %v916 = vld [vmem:[%s209 + $0xb1] sm:$0xff]
        %v917 = vld [vmem:[%s209 + $0xc1] sm:$0xff]
        %v918 = vld [vmem:[%s209 + $0xc9] sm:$0xff]
        %v919 = vld [vmem:[%s209 + $0xd9] sm:$0xff]
        %v920 = vld [vmem:[%s209 + $0xe1] sm:$0xff]
        %v921 = vld [vmem:[#allocation2] sm:$0xff]
        %v922 = vld [vmem:[#allocation2 + $0x8] sm:$0xff]
        %v923 = vld [vmem:[#allocation2 + $0x10] sm:$0xff]
        %v924 = vld [vmem:[#allocation2 + $0x18] sm:$0xff]
        %v925 = vld [vmem:[#allocation2 + $0x20] sm:$0xff]
        %v926 = vld [vmem:[#allocation2 + $0x28] sm:$0xff]
        %v927 = vld [vmem:[#allocation2 + $0x30] sm:$0xff]
        %v928 = vld [vmem:[#allocation2 + $0x38] sm:$0xff]
        %v929 = vld [vmem:[#allocation2 + $0x40] sm:$0xff]
        %v930 = vld [vmem:[#allocation2 + $0x48] sm:$0xff]
        %v931 = vld [vmem:[#allocation2 + $0x50] sm:$0xff]
        %v932 = vld [vmem:[#allocation2 + $0x58] sm:$0xff]
        %v933 = vld [vmem:[#allocation2 + $0x60] sm:$0xff]
        %v934 = vld [vmem:[#allocation2 + $0x68] sm:$0xff]
        %v935 = vld [vmem:[#allocation2 + $0x70] sm:$0xff]
        %v936 = vld [vmem:[#allocation2 + $0x78] sm:$0xff]
        %s937 = scalar_lea.vmem %s1, 4
        %v938 = vld [vmem:[%s937] sm:$0xf]
        %v940 = vsel %vm263, %v901, 0
        %v943 = vsel %vm263, %v902, 0
        %v946 = vsel %vm263, %v903, 0
        %v949 = vsel %vm263, %v904, 0
        %v952 = vsel %vm263, %v905, 0
        %v955 = vsel %vm263, %v906, 0
        %v958 = vsel %vm263, %v907, 0
        %v961 = vsel %vm263, %v908, 0
        %v964 = vsel %vm263, %v909, 0
        %v967 = vsel %vm263, %v910, 0
        %v970 = vsel %vm263, %v911, 0
        %v973 = vsel %vm263, %v912, 0
        %v976 = vsel %vm263, %v913, 0
        %v979 = vsel %vm263, %v914, 0
        %v982 = vsel %vm263, %v915, 0
        %v985 = vsel %vm263, %v916, 0
        %v988 = vsel %vm312, %v938, 0
        %990 = vmatprep.subr.mxu0 0.0
        %991 = vmatpush1.msra.mxu0 %v988
        %992 = vmatprep.subr.mxu0 0.0
        %993 = vmatpush1.msra.mxu0 0.0
        %994 = vmatprep.subr.mxu0 0.0
        %995 = vmatpush1.msra.mxu0 0.0
        %996 = vmatprep.subr.mxu0 0.0
        %997 = vmatpush1.msra.mxu0 0.0
        %998 = vmatprep.subr.mxu0 0.0
        %999 = vmatpush1.msra.mxu0 0.0
        %1000 = vmatprep.subr.mxu0 0.0
        %1001 = vmatpush1.msra.mxu0 0.0
        %1002 = vmatprep.subr.mxu0 0.0
        %1003 = vmatpush1.msra.mxu0 0.0
        %1004 = vmatprep.subr.mxu0 0.0
        %1005 = vmatpush1.msra.mxu0 0.0
        %1006 = vmatprep.subr.mxu0 0.0
        %1007 = vmatpush1.msra.mxu0 0.0
        %1008 = vmatprep.subr.mxu0 0.0
        %1009 = vmatpush1.msra.mxu0 0.0
        %1010 = vmatprep.subr.mxu0 0.0
        %1011 = vmatpush1.msra.mxu0 0.0
        %1012 = vmatprep.subr.mxu0 0.0
        %1013 = vmatpush1.msra.mxu0 0.0
        %1014 = vmatprep.subr.mxu0 0.0
        %1015 = vmatpush1.msra.mxu0 0.0
        %1016 = vmatprep.subr.mxu0 0.0
        %1017 = vmatpush1.msra.mxu0 0.0
        %1018 = vmatprep.subr.mxu0 0.0
        %1019 = vmatpush1.msra.mxu0 0.0
        %1020 = vmatprep.subr.mxu0 0.0
        %1021 = vmatpush1.msra.mxu0 0.0
        %1022 = vmatprep.subr.mxu0 0.0
        %1023 = vmatpush1.msra.mxu0 0.0
        %1024 = vmatprep.subr.mxu0 0.0
        %1025 = vmatpush1.msra.mxu0 0.0
        %1026 = vmatprep.subr.mxu0 0.0
        %1027 = vmatpush1.msra.mxu0 0.0
        %1028 = vmatprep.subr.mxu0 0.0
        %1029 = vmatpush1.msra.mxu0 0.0
        %1030 = vmatprep.subr.mxu0 0.0
        %1031 = vmatpush1.msra.mxu0 0.0
        %1032 = vmatprep.subr.mxu0 0.0
        %1033 = vmatpush1.msra.mxu0 0.0
        %1034 = vmatprep.subr.mxu0 0.0
        %1035 = vmatpush1.msra.mxu0 0.0
        %1036 = vmatprep.subr.mxu0 0.0
        %1037 = vmatpush1.msra.mxu0 0.0
        %1038 = vmatprep.subr.mxu0 0.0
        %1039 = vmatpush1.msra.mxu0 0.0
        %1040 = vmatprep.subr.mxu0 0.0
        %1041 = vmatpush1.msra.mxu0 0.0
        %1042 = vmatprep.subr.mxu0 0.0
        %1043 = vmatpush1.msra.mxu0 0.0
        %1044 = vmatprep.subr.mxu0 0.0
        %1045 = vmatpush1.msra.mxu0 0.0
        %1046 = vmatprep.subr.mxu0 0.0
        %1047 = vmatpush1.msra.mxu0 0.0
        %1048 = vmatprep.subr.mxu0 0.0
        %1049 = vmatpush1.msra.mxu0 0.0
        %1050 = vmatprep.subr.mxu0 0.0
        %1051 = vmatpush1.msra.mxu0 0.0
        %1052 = vmatprep.subr.mxu0 0.0
        %1053 = vmatpush1.msra.mxu0 0.0
        %1054 = vmatprep.mubr.f32.mxu0 0.0
        %1055 = vmatmul.mubr.f32.gmra.mrb[0].mxu0 %v940
        %v1056 = vpop.f32.mrb[0].mxu0
        %v1057 = vadd.f32 0.0, %v1056
        %v1058 = vpop.f32.mrb[0].mxu0
        %1059 = vmatprep.mubr.f32.mxu0 0.0
        %1060 = vmatmul.mubr.f32.gmra.mrb[0].mxu0 %v943
        %v1061 = vpop.f32.mrb[0].mxu0
        %v1062 = vadd.f32 0.0, %v1061
        %v1063 = vpop.f32.mrb[0].mxu0
        %1064 = vmatprep.mubr.f32.mxu0 0.0
        %1065 = vmatmul.mubr.f32.gmra.mrb[0].mxu0 %v946
        %v1066 = vpop.f32.mrb[0].mxu0
        %v1067 = vadd.f32 0.0, %v1066
        %v1068 = vpop.f32.mrb[0].mxu0
        %1069 = vmatprep.mubr.f32.mxu0 0.0
        %1070 = vmatmul.mubr.f32.gmra.mrb[0].mxu0 %v949
        %v1071 = vpop.f32.mrb[0].mxu0
        %v1072 = vadd.f32 0.0, %v1071
        %v1073 = vpop.f32.mrb[0].mxu0
        %1074 = vmatprep.mubr.f32.mxu0 0.0
        %1075 = vmatmul.mubr.f32.gmra.mrb[0].mxu0 %v952
        %v1076 = vpop.f32.mrb[0].mxu0
        %v1077 = vadd.f32 0.0, %v1076
        %v1078 = vpop.f32.mrb[0].mxu0
        %1079 = vmatprep.mubr.f32.mxu0 0.0
        %1080 = vmatmul.mubr.f32.gmra.mrb[0].mxu0 %v955
        %v1081 = vpop.f32.mrb[0].mxu0
        %v1082 = vadd.f32 0.0, %v1081
        %v1083 = vpop.f32.mrb[0].mxu0
        %1084 = vmatprep.mubr.f32.mxu0 0.0
        %1085 = vmatmul.mubr.f32.gmra.mrb[0].mxu0 %v958
        %v1086 = vpop.f32.mrb[0].mxu0
        %v1087 = vadd.f32 0.0, %v1086
        %v1088 = vpop.f32.mrb[0].mxu0
        %1089 = vmatprep.mubr.f32.mxu0 0.0
        %1090 = vmatmul.mubr.f32.gmra.mrb[0].mxu0 %v961
        %v1091 = vpop.f32.mrb[0].mxu0
        %v1092 = vadd.f32 0.0, %v1091
        %v1093 = vpop.f32.mrb[0].mxu0
        %1094 = vmatprep.mubr.f32.mxu0 0.0
        %1095 = vmatmul.mubr.f32.gmra.mrb[0].mxu0 %v964
        %v1096 = vpop.f32.mrb[0].mxu0
        %v1097 = vadd.f32 0.0, %v1096
        %v1098 = vpop.f32.mrb[0].mxu0
        %1099 = vmatprep.mubr.f32.mxu0 0.0
        %1100 = vmatmul.mubr.f32.gmra.mrb[0].mxu0 %v967
        %v1101 = vpop.f32.mrb[0].mxu0
        %v1102 = vadd.f32 0.0, %v1101
        %v1103 = vpop.f32.mrb[0].mxu0
        %1104 = vmatprep.mubr.f32.mxu0 0.0
        %1105 = vmatmul.mubr.f32.gmra.mrb[0].mxu0 %v970
        %v1106 = vpop.f32.mrb[0].mxu0
        %v1107 = vadd.f32 0.0, %v1106
        %v1108 = vpop.f32.mrb[0].mxu0
        %1109 = vmatprep.mubr.f32.mxu0 0.0
        %1110 = vmatmul.mubr.f32.gmra.mrb[0].mxu0 %v973
        %v1111 = vpop.f32.mrb[0].mxu0
        %v1112 = vadd.f32 0.0, %v1111
        %v1113 = vpop.f32.mrb[0].mxu0
        %1114 = vmatprep.mubr.f32.mxu0 0.0
        %1115 = vmatmul.mubr.f32.gmra.mrb[0].mxu0 %v976
        %v1116 = vpop.f32.mrb[0].mxu0
        %v1117 = vadd.f32 0.0, %v1116
        %v1118 = vpop.f32.mrb[0].mxu0
        %1119 = vmatprep.mubr.f32.mxu0 0.0
        %1120 = vmatmul.mubr.f32.gmra.mrb[0].mxu0 %v979
        %v1121 = vpop.f32.mrb[0].mxu0
        %v1122 = vadd.f32 0.0, %v1121
        %v1123 = vpop.f32.mrb[0].mxu0
        %1124 = vmatprep.mubr.f32.mxu0 0.0
        %1125 = vmatmul.mubr.f32.gmra.mrb[0].mxu0 %v982
        %v1126 = vpop.f32.mrb[0].mxu0
        %v1127 = vadd.f32 0.0, %v1126
        %v1128 = vpop.f32.mrb[0].mxu0
        %1129 = vmatprep.mubr.f32.mxu0 0.0
        %1130 = vmatmul.mubr.f32.gmra.mrb[0].mxu0 %v985
        %v1131 = vpop.f32.mrb[0].mxu0
        %v1132 = vadd.f32 0.0, %v1131
        %v1133 = vpop.f32.mrb[0].mxu0
        %1134 = vdwg.mxu0
        %v1135 = vadd.f32 %v921, %v1057
        %v1136 = vadd.f32 %v922, %v1062
        %v1137 = vadd.f32 %v923, %v1067
        %v1138 = vadd.f32 %v924, %v1072
        %v1139 = vadd.f32 %v925, %v1077
        %v1140 = vadd.f32 %v926, %v1082
        %v1141 = vadd.f32 %v927, %v1087
        %v1142 = vadd.f32 %v928, %v1092
        %v1143 = vadd.f32 %v929, %v1097
        %v1144 = vadd.f32 %v930, %v1102
        %v1145 = vadd.f32 %v931, %v1107
        %v1146 = vadd.f32 %v932, %v1112
        %v1147 = vadd.f32 %v933, %v1117
        %v1148 = vadd.f32 %v934, %v1122
        %v1149 = vadd.f32 %v935, %v1127
        %v1150 = vadd.f32 %v936, %v1132
        %1151 = vst [vmem:[#allocation2] sm:$0xff] %v1135
        %1152 = vst [vmem:[#allocation2 + $0x8] sm:$0xff] %v1136
        %1153 = vst [vmem:[#allocation2 + $0x10] sm:$0xff] %v1137
        %1154 = vst [vmem:[#allocation2 + $0x18] sm:$0xff] %v1138
        %1155 = vst [vmem:[#allocation2 + $0x20] sm:$0xff] %v1139
        %1156 = vst [vmem:[#allocation2 + $0x28] sm:$0xff] %v1140
        %1157 = vst [vmem:[#allocation2 + $0x30] sm:$0xff] %v1141
        %1158 = vst [vmem:[#allocation2 + $0x38] sm:$0xff] %v1142
        %1159 = vst [vmem:[#allocation2 + $0x40] sm:$0xff] %v1143
        %1160 = vst [vmem:[#allocation2 + $0x48] sm:$0xff] %v1144
        %1161 = vst [vmem:[#allocation2 + $0x50] sm:$0xff] %v1145
        %1162 = vst [vmem:[#allocation2 + $0x58] sm:$0xff] %v1146
        %1163 = vst [vmem:[#allocation2 + $0x60] sm:$0xff] %v1147
        %1164 = vst [vmem:[#allocation2 + $0x68] sm:$0xff] %v1148
        %1165 = vst [vmem:[#allocation2 + $0x70] sm:$0xff] %v1149
        %1166 = vst [vmem:[#allocation2 + $0x78] sm:$0xff] %v1150
        %v1167 = vld [vmem:[#allocation2] sm:$0xff]
        %v1168 = vld [vmem:[#allocation2 + $0x8] sm:$0xff]
        %v1169 = vld [vmem:[#allocation2 + $0x10] sm:$0xff]
        %v1170 = vld [vmem:[#allocation2 + $0x18] sm:$0xff]
        %v1171 = vld [vmem:[#allocation2 + $0x20] sm:$0xff]
        %v1172 = vld [vmem:[#allocation2 + $0x28] sm:$0xff]
        %v1173 = vld [vmem:[#allocation2 + $0x30] sm:$0xff]
        %v1174 = vld [vmem:[#allocation2 + $0x38] sm:$0xff]
        %v1175 = vld [vmem:[#allocation2 + $0x40] sm:$0xff]
        %v1176 = vld [vmem:[#allocation2 + $0x48] sm:$0xff]
        %v1177 = vld [vmem:[#allocation2 + $0x50] sm:$0xff]
        %v1178 = vld [vmem:[#allocation2 + $0x58] sm:$0xff]
        %v1179 = vld [vmem:[#allocation2 + $0x60] sm:$0xff]
        %v1180 = vld [vmem:[#allocation2 + $0x68] sm:$0xff]
        %v1181 = vld [vmem:[#allocation2 + $0x70] sm:$0xff]
        %v1182 = vld [vmem:[#allocation2 + $0x78] sm:$0xff]
        %s1183 = scalar_lea.vmem %s1, 16
        %v1184 = vld [vmem:[%s1183] sm:$0xf]
        %v1186 = vsel %vm263, %v917, 0
        %v1189 = vsel %vm263, %v918, 0
        %v1192 = vsel %vm312, %v1184, 0
        %1194 = vmatprep.subr.mxu0 0.0
        %1195 = vmatpush1.msra.mxu0 %v1192
        %1196 = vmatprep.subr.mxu0 0.0
        %1197 = vmatpush1.msra.mxu0 0.0
        %1198 = vmatprep.subr.mxu0 0.0
        %1199 = vmatpush1.msra.mxu0 0.0
        %1200 = vmatprep.subr.mxu0 0.0
        %1201 = vmatpush1.msra.mxu0 0.0
        %1202 = vmatprep.subr.mxu0 0.0
        %1203 = vmatpush1.msra.mxu0 0.0
        %1204 = vmatprep.subr.mxu0 0.0
        %1205 = vmatpush1.msra.mxu0 0.0
        %1206 = vmatprep.subr.mxu0 0.0
        %1207 = vmatpush1.msra.mxu0 0.0
        %1208 = vmatprep.subr.mxu0 0.0
        %1209 = vmatpush1.msra.mxu0 0.0
        %1210 = vmatprep.subr.mxu0 0.0
        %1211 = vmatpush1.msra.mxu0 0.0
        %1212 = vmatprep.subr.mxu0 0.0
        %1213 = vmatpush1.msra.mxu0 0.0
        %1214 = vmatprep.subr.mxu0 0.0
        %1215 = vmatpush1.msra.mxu0 0.0
        %1216 = vmatprep.subr.mxu0 0.0
        %1217 = vmatpush1.msra.mxu0 0.0
        %1218 = vmatprep.subr.mxu0 0.0
        %1219 = vmatpush1.msra.mxu0 0.0
        %1220 = vmatprep.subr.mxu0 0.0
        %1221 = vmatpush1.msra.mxu0 0.0
        %1222 = vmatprep.subr.mxu0 0.0
        %1223 = vmatpush1.msra.mxu0 0.0
        %1224 = vmatprep.subr.mxu0 0.0
        %1225 = vmatpush1.msra.mxu0 0.0
        %1226 = vmatprep.subr.mxu0 0.0
        %1227 = vmatpush1.msra.mxu0 0.0
        %1228 = vmatprep.subr.mxu0 0.0
        %1229 = vmatpush1.msra.mxu0 0.0
        %1230 = vmatprep.subr.mxu0 0.0
        %1231 = vmatpush1.msra.mxu0 0.0
        %1232 = vmatprep.subr.mxu0 0.0
        %1233 = vmatpush1.msra.mxu0 0.0
        %1234 = vmatprep.subr.mxu0 0.0
        %1235 = vmatpush1.msra.mxu0 0.0
        %1236 = vmatprep.subr.mxu0 0.0
        %1237 = vmatpush1.msra.mxu0 0.0
        %1238 = vmatprep.subr.mxu0 0.0
        %1239 = vmatpush1.msra.mxu0 0.0
        %1240 = vmatprep.subr.mxu0 0.0
        %1241 = vmatpush1.msra.mxu0 0.0
        %1242 = vmatprep.subr.mxu0 0.0
        %1243 = vmatpush1.msra.mxu0 0.0
        %1244 = vmatprep.subr.mxu0 0.0
        %1245 = vmatpush1.msra.mxu0 0.0
        %1246 = vmatprep.subr.mxu0 0.0
        %1247 = vmatpush1.msra.mxu0 0.0
        %1248 = vmatprep.subr.mxu0 0.0
        %1249 = vmatpush1.msra.mxu0 0.0
        %1250 = vmatprep.subr.mxu0 0.0
        %1251 = vmatpush1.msra.mxu0 0.0
        %1252 = vmatprep.subr.mxu0 0.0
        %1253 = vmatpush1.msra.mxu0 0.0
        %1254 = vmatprep.subr.mxu0 0.0
        %1255 = vmatpush1.msra.mxu0 0.0
        %1256 = vmatprep.subr.mxu0 0.0
        %1257 = vmatpush1.msra.mxu0 0.0
        %1258 = vmatprep.mubr.f32.mxu0 0.0
        %1259 = vmatmul.mubr.f32.gmra.mrb[0].mxu0 %v946
        %v1260 = vpop.f32.mrb[0].mxu0
        %v1261 = vadd.f32 0.0, %v1260
        %v1262 = vpop.f32.mrb[0].mxu0
        %1263 = vmatprep.mubr.f32.mxu0 0.0
        %1264 = vmatmul.mubr.f32.gmra.mrb[0].mxu0 %v949
        %v1265 = vpop.f32.mrb[0].mxu0
        %v1266 = vadd.f32 0.0, %v1265
        %v1267 = vpop.f32.mrb[0].mxu0
        %1268 = vmatprep.mubr.f32.mxu0 0.0
        %1269 = vmatmul.mubr.f32.gmra.mrb[0].mxu0 %v952
        %v1270 = vpop.f32.mrb[0].mxu0
        %v1271 = vadd.f32 0.0, %v1270
        %v1272 = vpop.f32.mrb[0].mxu0
        %1273 = vmatprep.mubr.f32.mxu0 0.0
        %1274 = vmatmul.mubr.f32.gmra.mrb[0].mxu0 %v955
        %v1275 = vpop.f32.mrb[0].mxu0
        %v1276 = vadd.f32 0.0, %v1275
        %v1277 = vpop.f32.mrb[0].mxu0
        %1278 = vmatprep.mubr.f32.mxu0 0.0
        %1279 = vmatmul.mubr.f32.gmra.mrb[0].mxu0 %v958
        %v1280 = vpop.f32.mrb[0].mxu0
        %v1281 = vadd.f32 0.0, %v1280
        %v1282 = vpop.f32.mrb[0].mxu0
        %1283 = vmatprep.mubr.f32.mxu0 0.0
        %1284 = vmatmul.mubr.f32.gmra.mrb[0].mxu0 %v961
        %v1285 = vpop.f32.mrb[0].mxu0
        %v1286 = vadd.f32 0.0, %v1285
        %v1287 = vpop.f32.mrb[0].mxu0
        %1288 = vmatprep.mubr.f32.mxu0 0.0
        %1289 = vmatmul.mubr.f32.gmra.mrb[0].mxu0 %v964
        %v1290 = vpop.f32.mrb[0].mxu0
        %v1291 = vadd.f32 0.0, %v1290
        %v1292 = vpop.f32.mrb[0].mxu0
        %1293 = vmatprep.mubr.f32.mxu0 0.0
        %1294 = vmatmul.mubr.f32.gmra.mrb[0].mxu0 %v967
        %v1295 = vpop.f32.mrb[0].mxu0
        %v1296 = vadd.f32 0.0, %v1295
        %v1297 = vpop.f32.mrb[0].mxu0
        %1298 = vmatprep.mubr.f32.mxu0 0.0
        %1299 = vmatmul.mubr.f32.gmra.mrb[0].mxu0 %v970
        %v1300 = vpop.f32.mrb[0].mxu0
        %v1301 = vadd.f32 0.0, %v1300
        %v1302 = vpop.f32.mrb[0].mxu0
        %1303 = vmatprep.mubr.f32.mxu0 0.0
        %1304 = vmatmul.mubr.f32.gmra.mrb[0].mxu0 %v973
        %v1305 = vpop.f32.mrb[0].mxu0
        %v1306 = vadd.f32 0.0, %v1305
        %v1307 = vpop.f32.mrb[0].mxu0
        %1308 = vmatprep.mubr.f32.mxu0 0.0
        %1309 = vmatmul.mubr.f32.gmra.mrb[0].mxu0 %v976
        %v1310 = vpop.f32.mrb[0].mxu0
        %v1311 = vadd.f32 0.0, %v1310
        %v1312 = vpop.f32.mrb[0].mxu0
        %1313 = vmatprep.mubr.f32.mxu0 0.0
        %1314 = vmatmul.mubr.f32.gmra.mrb[0].mxu0 %v979
        %v1315 = vpop.f32.mrb[0].mxu0
        %v1316 = vadd.f32 0.0, %v1315
        %v1317 = vpop.f32.mrb[0].mxu0
        %1318 = vmatprep.mubr.f32.mxu0 0.0
        %1319 = vmatmul.mubr.f32.gmra.mrb[0].mxu0 %v982
        %v1320 = vpop.f32.mrb[0].mxu0
        %v1321 = vadd.f32 0.0, %v1320
        %v1322 = vpop.f32.mrb[0].mxu0
        %1323 = vmatprep.mubr.f32.mxu0 0.0
        %1324 = vmatmul.mubr.f32.gmra.mrb[0].mxu0 %v985
        %v1325 = vpop.f32.mrb[0].mxu0
        %v1326 = vadd.f32 0.0, %v1325
        %v1327 = vpop.f32.mrb[0].mxu0
        %1328 = vmatprep.mubr.f32.mxu0 0.0
        %1329 = vmatmul.mubr.f32.gmra.mrb[0].mxu0 %v1186
        %v1330 = vpop.f32.mrb[0].mxu0
        %v1331 = vadd.f32 0.0, %v1330
        %v1332 = vpop.f32.mrb[0].mxu0
        %1333 = vmatprep.mubr.f32.mxu0 0.0
        %1334 = vmatmul.mubr.f32.gmra.mrb[0].mxu0 %v1189
        %v1335 = vpop.f32.mrb[0].mxu0
        %v1336 = vadd.f32 0.0, %v1335
        %v1337 = vpop.f32.mrb[0].mxu0
        %1338 = vdwg.mxu0
        %v1339 = vadd.f32 %v1167, %v1261
        %v1340 = vadd.f32 %v1168, %v1266
        %v1341 = vadd.f32 %v1169, %v1271
        %v1342 = vadd.f32 %v1170, %v1276
        %v1343 = vadd.f32 %v1171, %v1281
        %v1344 = vadd.f32 %v1172, %v1286
        %v1345 = vadd.f32 %v1173, %v1291
        %v1346 = vadd.f32 %v1174, %v1296
        %v1347 = vadd.f32 %v1175, %v1301
        %v1348 = vadd.f32 %v1176, %v1306
        %v1349 = vadd.f32 %v1177, %v1311
        %v1350 = vadd.f32 %v1178, %v1316
        %v1351 = vadd.f32 %v1179, %v1321
        %v1352 = vadd.f32 %v1180, %v1326
        %v1353 = vadd.f32 %v1181, %v1331
        %v1354 = vadd.f32 %v1182, %v1336
        %1355 = vst [vmem:[#allocation2] sm:$0xff] %v1339
        %1356 = vst [vmem:[#allocation2 + $0x8] sm:$0xff] %v1340
        %1357 = vst [vmem:[#allocation2 + $0x10] sm:$0xff] %v1341
        %1358 = vst [vmem:[#allocation2 + $0x18] sm:$0xff] %v1342
        %1359 = vst [vmem:[#allocation2 + $0x20] sm:$0xff] %v1343
        %1360 = vst [vmem:[#allocation2 + $0x28] sm:$0xff] %v1344
        %1361 = vst [vmem:[#allocation2 + $0x30] sm:$0xff] %v1345
        %1362 = vst [vmem:[#allocation2 + $0x38] sm:$0xff] %v1346
        %1363 = vst [vmem:[#allocation2 + $0x40] sm:$0xff] %v1347
        %1364 = vst [vmem:[#allocation2 + $0x48] sm:$0xff] %v1348
        %1365 = vst [vmem:[#allocation2 + $0x50] sm:$0xff] %v1349
        %1366 = vst [vmem:[#allocation2 + $0x58] sm:$0xff] %v1350
        %1367 = vst [vmem:[#allocation2 + $0x60] sm:$0xff] %v1351
        %1368 = vst [vmem:[#allocation2 + $0x68] sm:$0xff] %v1352
        %1369 = vst [vmem:[#allocation2 + $0x70] sm:$0xff] %v1353
        %1370 = vst [vmem:[#allocation2 + $0x78] sm:$0xff] %v1354
        %v1371 = vld [vmem:[#allocation2] sm:$0xff]
        %v1372 = vld [vmem:[#allocation2 + $0x8] sm:$0xff]
        %v1373 = vld [vmem:[#allocation2 + $0x10] sm:$0xff]
        %v1374 = vld [vmem:[#allocation2 + $0x18] sm:$0xff]
        %v1375 = vld [vmem:[#allocation2 + $0x20] sm:$0xff]
        %v1376 = vld [vmem:[#allocation2 + $0x28] sm:$0xff]
        %v1377 = vld [vmem:[#allocation2 + $0x30] sm:$0xff]
        %v1378 = vld [vmem:[#allocation2 + $0x38] sm:$0xff]
        %v1379 = vld [vmem:[#allocation2 + $0x40] sm:$0xff]
        %v1380 = vld [vmem:[#allocation2 + $0x48] sm:$0xff]
        %v1381 = vld [vmem:[#allocation2 + $0x50] sm:$0xff]
        %v1382 = vld [vmem:[#allocation2 + $0x58] sm:$0xff]
        %v1383 = vld [vmem:[#allocation2 + $0x60] sm:$0xff]
        %v1384 = vld [vmem:[#allocation2 + $0x68] sm:$0xff]
        %v1385 = vld [vmem:[#allocation2 + $0x70] sm:$0xff]
        %v1386 = vld [vmem:[#allocation2 + $0x78] sm:$0xff]
        %s1387 = scalar_lea.vmem %s1, 28
        %v1388 = vld [vmem:[%s1387] sm:$0xf]
        %v1390 = vsel %vm263, %v919, 0
        %v1393 = vsel %vm263, %v920, 0
        %v1396 = vsel %vm312, %v1388, 0
        %1398 = vmatprep.subr.mxu0 0.0
        %1399 = vmatpush1.msra.mxu0 %v1396
        %1400 = vmatprep.subr.mxu0 0.0
        %1401 = vmatpush1.msra.mxu0 0.0
        %1402 = vmatprep.subr.mxu0 0.0
        %1403 = vmatpush1.msra.mxu0 0.0
        %1404 = vmatprep.subr.mxu0 0.0
        %1405 = vmatpush1.msra.mxu0 0.0
        %1406 = vmatprep.subr.mxu0 0.0
        %1407 = vmatpush1.msra.mxu0 0.0
        %1408 = vmatprep.subr.mxu0 0.0
        %1409 = vmatpush1.msra.mxu0 0.0
        %1410 = vmatprep.subr.mxu0 0.0
        %1411 = vmatpush1.msra.mxu0 0.0
        %1412 = vmatprep.subr.mxu0 0.0
        %1413 = vmatpush1.msra.mxu0 0.0
        %1414 = vmatprep.subr.mxu0 0.0
        %1415 = vmatpush1.msra.mxu0 0.0
        %1416 = vmatprep.subr.mxu0 0.0
        %1417 = vmatpush1.msra.mxu0 0.0
        %1418 = vmatprep.subr.mxu0 0.0
        %1419 = vmatpush1.msra.mxu0 0.0
        %1420 = vmatprep.subr.mxu0 0.0
        %1421 = vmatpush1.msra.mxu0 0.0
        %1422 = vmatprep.subr.mxu0 0.0
        %1423 = vmatpush1.msra.mxu0 0.0
        %1424 = vmatprep.subr.mxu0 0.0
        %1425 = vmatpush1.msra.mxu0 0.0
        %1426 = vmatprep.subr.mxu0 0.0
        %1427 = vmatpush1.msra.mxu0 0.0
        %1428 = vmatprep.subr.mxu0 0.0
        %1429 = vmatpush1.msra.mxu0 0.0
        %1430 = vmatprep.subr.mxu0 0.0
        %1431 = vmatpush1.msra.mxu0 0.0
        %1432 = vmatprep.subr.mxu0 0.0
        %1433 = vmatpush1.msra.mxu0 0.0
        %1434 = vmatprep.subr.mxu0 0.0
        %1435 = vmatpush1.msra.mxu0 0.0
        %1436 = vmatprep.subr.mxu0 0.0
        %1437 = vmatpush1.msra.mxu0 0.0
        %1438 = vmatprep.subr.mxu0 0.0
        %1439 = vmatpush1.msra.mxu0 0.0
        %1440 = vmatprep.subr.mxu0 0.0
        %1441 = vmatpush1.msra.mxu0 0.0
        %1442 = vmatprep.subr.mxu0 0.0
        %1443 = vmatpush1.msra.mxu0 0.0
        %1444 = vmatprep.subr.mxu0 0.0
        %1445 = vmatpush1.msra.mxu0 0.0
        %1446 = vmatprep.subr.mxu0 0.0
        %1447 = vmatpush1.msra.mxu0 0.0
        %1448 = vmatprep.subr.mxu0 0.0
        %1449 = vmatpush1.msra.mxu0 0.0
        %1450 = vmatprep.subr.mxu0 0.0
        %1451 = vmatpush1.msra.mxu0 0.0
        %1452 = vmatprep.subr.mxu0 0.0
        %1453 = vmatpush1.msra.mxu0 0.0
        %1454 = vmatprep.subr.mxu0 0.0
        %1455 = vmatpush1.msra.mxu0 0.0
        %1456 = vmatprep.subr.mxu0 0.0
        %1457 = vmatpush1.msra.mxu0 0.0
        %1458 = vmatprep.subr.mxu0 0.0
        %1459 = vmatpush1.msra.mxu0 0.0
        %1460 = vmatprep.subr.mxu0 0.0
        %1461 = vmatpush1.msra.mxu0 0.0
        %1462 = vmatprep.mubr.f32.mxu0 0.0
        %1463 = vmatmul.mubr.f32.gmra.mrb[0].mxu0 %v952
        %v1464 = vpop.f32.mrb[0].mxu0
        %v1465 = vadd.f32 0.0, %v1464
        %v1466 = vpop.f32.mrb[0].mxu0
        %1467 = vmatprep.mubr.f32.mxu0 0.0
        %1468 = vmatmul.mubr.f32.gmra.mrb[0].mxu0 %v955
        %v1469 = vpop.f32.mrb[0].mxu0
        %v1470 = vadd.f32 0.0, %v1469
        %v1471 = vpop.f32.mrb[0].mxu0
        %1472 = vmatprep.mubr.f32.mxu0 0.0
        %1473 = vmatmul.mubr.f32.gmra.mrb[0].mxu0 %v958
        %v1474 = vpop.f32.mrb[0].mxu0
        %v1475 = vadd.f32 0.0, %v1474
        %v1476 = vpop.f32.mrb[0].mxu0
        %1477 = vmatprep.mubr.f32.mxu0 0.0
        %1478 = vmatmul.mubr.f32.gmra.mrb[0].mxu0 %v961
        %v1479 = vpop.f32.mrb[0].mxu0
        %v1480 = vadd.f32 0.0, %v1479
        %v1481 = vpop.f32.mrb[0].mxu0
        %1482 = vmatprep.mubr.f32.mxu0 0.0
        %1483 = vmatmul.mubr.f32.gmra.mrb[0].mxu0 %v964
        %v1484 = vpop.f32.mrb[0].mxu0
        %v1485 = vadd.f32 0.0, %v1484
        %v1486 = vpop.f32.mrb[0].mxu0
        %1487 = vmatprep.mubr.f32.mxu0 0.0
        %1488 = vmatmul.mubr.f32.gmra.mrb[0].mxu0 %v967
        %v1489 = vpop.f32.mrb[0].mxu0
        %v1490 = vadd.f32 0.0, %v1489
        %v1491 = vpop.f32.mrb[0].mxu0
        %1492 = vmatprep.mubr.f32.mxu0 0.0
        %1493 = vmatmul.mubr.f32.gmra.mrb[0].mxu0 %v970
        %v1494 = vpop.f32.mrb[0].mxu0
        %v1495 = vadd.f32 0.0, %v1494
        %v1496 = vpop.f32.mrb[0].mxu0
        %1497 = vmatprep.mubr.f32.mxu0 0.0
        %1498 = vmatmul.mubr.f32.gmra.mrb[0].mxu0 %v973
        %v1499 = vpop.f32.mrb[0].mxu0
        %v1500 = vadd.f32 0.0, %v1499
        %v1501 = vpop.f32.mrb[0].mxu0
        %1502 = vmatprep.mubr.f32.mxu0 0.0
        %1503 = vmatmul.mubr.f32.gmra.mrb[0].mxu0 %v976
        %v1504 = vpop.f32.mrb[0].mxu0
        %v1505 = vadd.f32 0.0, %v1504
        %v1506 = vpop.f32.mrb[0].mxu0
        %1507 = vmatprep.mubr.f32.mxu0 0.0
        %1508 = vmatmul.mubr.f32.gmra.mrb[0].mxu0 %v979
        %v1509 = vpop.f32.mrb[0].mxu0
        %v1510 = vadd.f32 0.0, %v1509
        %v1511 = vpop.f32.mrb[0].mxu0
        %1512 = vmatprep.mubr.f32.mxu0 0.0
        %1513 = vmatmul.mubr.f32.gmra.mrb[0].mxu0 %v982
        %v1514 = vpop.f32.mrb[0].mxu0
        %v1515 = vadd.f32 0.0, %v1514
        %v1516 = vpop.f32.mrb[0].mxu0
        %1517 = vmatprep.mubr.f32.mxu0 0.0
        %1518 = vmatmul.mubr.f32.gmra.mrb[0].mxu0 %v985
        %v1519 = vpop.f32.mrb[0].mxu0
        %v1520 = vadd.f32 0.0, %v1519
        %v1521 = vpop.f32.mrb[0].mxu0
        %1522 = vmatprep.mubr.f32.mxu0 0.0
        %1523 = vmatmul.mubr.f32.gmra.mrb[0].mxu0 %v1186
        %v1524 = vpop.f32.mrb[0].mxu0
        %v1525 = vadd.f32 0.0, %v1524
        %v1526 = vpop.f32.mrb[0].mxu0
        %1527 = vmatprep.mubr.f32.mxu0 0.0
        %1528 = vmatmul.mubr.f32.gmra.mrb[0].mxu0 %v1189
        %v1529 = vpop.f32.mrb[0].mxu0
        %v1530 = vadd.f32 0.0, %v1529
        %v1531 = vpop.f32.mrb[0].mxu0
        %1532 = vmatprep.mubr.f32.mxu0 0.0
        %1533 = vmatmul.mubr.f32.gmra.mrb[0].mxu0 %v1390
        %v1534 = vpop.f32.mrb[0].mxu0
        %v1535 = vadd.f32 0.0, %v1534
        %v1536 = vpop.f32.mrb[0].mxu0
        %1537 = vmatprep.mubr.f32.mxu0 0.0
        %1538 = vmatmul.mubr.f32.gmra.mrb[0].mxu0 %v1393
        %v1539 = vpop.f32.mrb[0].mxu0
        %v1540 = vadd.f32 0.0, %v1539
        %v1541 = vpop.f32.mrb[0].mxu0
        %1542 = vdwg.mxu0
        %v1543 = vadd.f32 %v1371, %v1465
        %v1544 = vadd.f32 %v1372, %v1470
        %v1545 = vadd.f32 %v1373, %v1475
        %v1546 = vadd.f32 %v1374, %v1480
        %v1547 = vadd.f32 %v1375, %v1485
        %v1548 = vadd.f32 %v1376, %v1490
        %v1549 = vadd.f32 %v1377, %v1495
        %v1550 = vadd.f32 %v1378, %v1500
        %v1551 = vadd.f32 %v1379, %v1505
        %v1552 = vadd.f32 %v1380, %v1510
        %v1553 = vadd.f32 %v1381, %v1515
        %v1554 = vadd.f32 %v1382, %v1520
        %v1555 = vadd.f32 %v1383, %v1525
        %v1556 = vadd.f32 %v1384, %v1530
        %v1557 = vadd.f32 %v1385, %v1535
        %v1558 = vadd.f32 %v1386, %v1540
        %1559 = vst [vmem:[#allocation2] sm:$0xff] %v1543
        %1560 = vst [vmem:[#allocation2 + $0x8] sm:$0xff] %v1544
        %1561 = vst [vmem:[#allocation2 + $0x10] sm:$0xff] %v1545
        %1562 = vst [vmem:[#allocation2 + $0x18] sm:$0xff] %v1546
        %1563 = vst [vmem:[#allocation2 + $0x20] sm:$0xff] %v1547
        %1564 = vst [vmem:[#allocation2 + $0x28] sm:$0xff] %v1548
        %1565 = vst [vmem:[#allocation2 + $0x30] sm:$0xff] %v1549
        %1566 = vst [vmem:[#allocation2 + $0x38] sm:$0xff] %v1550
        %1567 = vst [vmem:[#allocation2 + $0x40] sm:$0xff] %v1551
        %1568 = vst [vmem:[#allocation2 + $0x48] sm:$0xff] %v1552
        %1569 = vst [vmem:[#allocation2 + $0x50] sm:$0xff] %v1553
        %1570 = vst [vmem:[#allocation2 + $0x58] sm:$0xff] %v1554
        %1571 = vst [vmem:[#allocation2 + $0x60] sm:$0xff] %v1555
        %1572 = vst [vmem:[#allocation2 + $0x68] sm:$0xff] %v1556
        %1573 = vst [vmem:[#allocation2 + $0x70] sm:$0xff] %v1557
        %1574 = vst [vmem:[#allocation2 + $0x78] sm:$0xff] %v1558
        %v1575 = vld [vmem:[%s209 + $0x2] sm:$0xff]
        %v1576 = vld [vmem:[%s209 + $0xa] sm:$0xff]
        %v1577 = vld [vmem:[%s209 + $0x1a] sm:$0xff]
        %v1578 = vld [vmem:[%s209 + $0x22] sm:$0xff]
        %v1579 = vld [vmem:[%s209 + $0x32] sm:$0xff]
        %v1580 = vld [vmem:[%s209 + $0x3a] sm:$0xff]
        %v1581 = vld [vmem:[%s209 + $0x4a] sm:$0xff]
        %v1582 = vld [vmem:[%s209 + $0x52] sm:$0xff]
        %v1583 = vld [vmem:[%s209 + $0x62] sm:$0xff]
        %v1584 = vld [vmem:[%s209 + $0x6a] sm:$0xff]
        %v1585 = vld [vmem:[%s209 + $0x7a] sm:$0xff]
        %v1586 = vld [vmem:[%s209 + $0x82] sm:$0xff]
        %v1587 = vld [vmem:[%s209 + $0x92] sm:$0xff]
        %v1588 = vld [vmem:[%s209 + $0x9a] sm:$0xff]
        %v1589 = vld [vmem:[%s209 + $0xaa] sm:$0xff]
        %v1590 = vld [vmem:[%s209 + $0xb2] sm:$0xff]
        %v1591 = vld [vmem:[%s209 + $0xc2] sm:$0xff]
        %v1592 = vld [vmem:[%s209 + $0xca] sm:$0xff]
        %v1593 = vld [vmem:[%s209 + $0xda] sm:$0xff]
        %v1594 = vld [vmem:[%s209 + $0xe2] sm:$0xff]
        %v1595 = vld [vmem:[#allocation2] sm:$0xff]
        %v1596 = vld [vmem:[#allocation2 + $0x8] sm:$0xff]
        %v1597 = vld [vmem:[#allocation2 + $0x10] sm:$0xff]
        %v1598 = vld [vmem:[#allocation2 + $0x18] sm:$0xff]
        %v1599 = vld [vmem:[#allocation2 + $0x20] sm:$0xff]
        %v1600 = vld [vmem:[#allocation2 + $0x28] sm:$0xff]
        %v1601 = vld [vmem:[#allocation2 + $0x30] sm:$0xff]
        %v1602 = vld [vmem:[#allocation2 + $0x38] sm:$0xff]
        %v1603 = vld [vmem:[#allocation2 + $0x40] sm:$0xff]
        %v1604 = vld [vmem:[#allocation2 + $0x48] sm:$0xff]
        %v1605 = vld [vmem:[#allocation2 + $0x50] sm:$0xff]
        %v1606 = vld [vmem:[#allocation2 + $0x58] sm:$0xff]
        %v1607 = vld [vmem:[#allocation2 + $0x60] sm:$0xff]
        %v1608 = vld [vmem:[#allocation2 + $0x68] sm:$0xff]
        %v1609 = vld [vmem:[#allocation2 + $0x70] sm:$0xff]
        %v1610 = vld [vmem:[#allocation2 + $0x78] sm:$0xff]
        %s1611 = scalar_lea.vmem %s1, 8
        %v1612 = vld [vmem:[%s1611] sm:$0xf]
        %v1614 = vsel %vm263, %v1575, 0
        %v1617 = vsel %vm263, %v1576, 0
        %v1620 = vsel %vm263, %v1577, 0
        %v1623 = vsel %vm263, %v1578, 0
        %v1626 = vsel %vm263, %v1579, 0
        %v1629 = vsel %vm263, %v1580, 0
        %v1632 = vsel %vm263, %v1581, 0
        %v1635 = vsel %vm263, %v1582, 0
        %v1638 = vsel %vm263, %v1583, 0
        %v1641 = vsel %vm263, %v1584, 0
        %v1644 = vsel %vm263, %v1585, 0
        %v1647 = vsel %vm263, %v1586, 0
        %v1650 = vsel %vm263, %v1587, 0
        %v1653 = vsel %vm263, %v1588, 0
        %v1656 = vsel %vm263, %v1589, 0
        %v1659 = vsel %vm263, %v1590, 0
        %v1662 = vsel %vm312, %v1612, 0
        %1664 = vmatprep.subr.mxu0 0.0
        %1665 = vmatpush1.msra.mxu0 %v1662
        %1666 = vmatprep.subr.mxu0 0.0
        %1667 = vmatpush1.msra.mxu0 0.0
        %1668 = vmatprep.subr.mxu0 0.0
        %1669 = vmatpush1.msra.mxu0 0.0
        %1670 = vmatprep.subr.mxu0 0.0
        %1671 = vmatpush1.msra.mxu0 0.0
        %1672 = vmatprep.subr.mxu0 0.0
        %1673 = vmatpush1.msra.mxu0 0.0
        %1674 = vmatprep.subr.mxu0 0.0
        %1675 = vmatpush1.msra.mxu0 0.0
        %1676 = vmatprep.subr.mxu0 0.0
        %1677 = vmatpush1.msra.mxu0 0.0
        %1678 = vmatprep.subr.mxu0 0.0
        %1679 = vmatpush1.msra.mxu0 0.0
        %1680 = vmatprep.subr.mxu0 0.0
        %1681 = vmatpush1.msra.mxu0 0.0
        %1682 = vmatprep.subr.mxu0 0.0
        %1683 = vmatpush1.msra.mxu0 0.0
        %1684 = vmatprep.subr.mxu0 0.0
        %1685 = vmatpush1.msra.mxu0 0.0
        %1686 = vmatprep.subr.mxu0 0.0
        %1687 = vmatpush1.msra.mxu0 0.0
        %1688 = vmatprep.subr.mxu0 0.0
        %1689 = vmatpush1.msra.mxu0 0.0
        %1690 = vmatprep.subr.mxu0 0.0
        %1691 = vmatpush1.msra.mxu0 0.0
        %1692 = vmatprep.subr.mxu0 0.0
        %1693 = vmatpush1.msra.mxu0 0.0
        %1694 = vmatprep.subr.mxu0 0.0
        %1695 = vmatpush1.msra.mxu0 0.0
        %1696 = vmatprep.subr.mxu0 0.0
        %1697 = vmatpush1.msra.mxu0 0.0
        %1698 = vmatprep.subr.mxu0 0.0
        %1699 = vmatpush1.msra.mxu0 0.0
        %1700 = vmatprep.subr.mxu0 0.0
        %1701 = vmatpush1.msra.mxu0 0.0
        %1702 = vmatprep.subr.mxu0 0.0
        %1703 = vmatpush1.msra.mxu0 0.0
        %1704 = vmatprep.subr.mxu0 0.0
        %1705 = vmatpush1.msra.mxu0 0.0
        %1706 = vmatprep.subr.mxu0 0.0
        %1707 = vmatpush1.msra.mxu0 0.0
        %1708 = vmatprep.subr.mxu0 0.0
        %1709 = vmatpush1.msra.mxu0 0.0
        %1710 = vmatprep.subr.mxu0 0.0
        %1711 = vmatpush1.msra.mxu0 0.0
        %1712 = vmatprep.subr.mxu0 0.0
        %1713 = vmatpush1.msra.mxu0 0.0
        %1714 = vmatprep.subr.mxu0 0.0
        %1715 = vmatpush1.msra.mxu0 0.0
        %1716 = vmatprep.subr.mxu0 0.0
        %1717 = vmatpush1.msra.mxu0 0.0
        %1718 = vmatprep.subr.mxu0 0.0
        %1719 = vmatpush1.msra.mxu0 0.0
        %1720 = vmatprep.subr.mxu0 0.0
        %1721 = vmatpush1.msra.mxu0 0.0
        %1722 = vmatprep.subr.mxu0 0.0
        %1723 = vmatpush1.msra.mxu0 0.0
        %1724 = vmatprep.subr.mxu0 0.0
        %1725 = vmatpush1.msra.mxu0 0.0
        %1726 = vmatprep.subr.mxu0 0.0
        %1727 = vmatpush1.msra.mxu0 0.0
        %1728 = vmatprep.mubr.f32.mxu0 0.0
        %1729 = vmatmul.mubr.f32.gmra.mrb[0].mxu0 %v1614
        %v1730 = vpop.f32.mrb[0].mxu0
        %v1731 = vadd.f32 0.0, %v1730
        %v1732 = vpop.f32.mrb[0].mxu0
        %1733 = vmatprep.mubr.f32.mxu0 0.0
        %1734 = vmatmul.mubr.f32.gmra.mrb[0].mxu0 %v1617
        %v1735 = vpop.f32.mrb[0].mxu0
        %v1736 = vadd.f32 0.0, %v1735
        %v1737 = vpop.f32.mrb[0].mxu0
        %1738 = vmatprep.mubr.f32.mxu0 0.0
        %1739 = vmatmul.mubr.f32.gmra.mrb[0].mxu0 %v1620
        %v1740 = vpop.f32.mrb[0].mxu0
        %v1741 = vadd.f32 0.0, %v1740
        %v1742 = vpop.f32.mrb[0].mxu0
        %1743 = vmatprep.mubr.f32.mxu0 0.0
        %1744 = vmatmul.mubr.f32.gmra.mrb[0].mxu0 %v1623
        %v1745 = vpop.f32.mrb[0].mxu0
        %v1746 = vadd.f32 0.0, %v1745
        %v1747 = vpop.f32.mrb[0].mxu0
        %1748 = vmatprep.mubr.f32.mxu0 0.0
        %1749 = vmatmul.mubr.f32.gmra.mrb[0].mxu0 %v1626
        %v1750 = vpop.f32.mrb[0].mxu0
        %v1751 = vadd.f32 0.0, %v1750
        %v1752 = vpop.f32.mrb[0].mxu0
        %1753 = vmatprep.mubr.f32.mxu0 0.0
        %1754 = vmatmul.mubr.f32.gmra.mrb[0].mxu0 %v1629
        %v1755 = vpop.f32.mrb[0].mxu0
        %v1756 = vadd.f32 0.0, %v1755
        %v1757 = vpop.f32.mrb[0].mxu0
        %1758 = vmatprep.mubr.f32.mxu0 0.0
        %1759 = vmatmul.mubr.f32.gmra.mrb[0].mxu0 %v1632
        %v1760 = vpop.f32.mrb[0].mxu0
        %v1761 = vadd.f32 0.0, %v1760
        %v1762 = vpop.f32.mrb[0].mxu0
        %1763 = vmatprep.mubr.f32.mxu0 0.0
        %1764 = vmatmul.mubr.f32.gmra.mrb[0].mxu0 %v1635
        %v1765 = vpop.f32.mrb[0].mxu0
        %v1766 = vadd.f32 0.0, %v1765
        %v1767 = vpop.f32.mrb[0].mxu0
        %1768 = vmatprep.mubr.f32.mxu0 0.0
        %1769 = vmatmul.mubr.f32.gmra.mrb[0].mxu0 %v1638
        %v1770 = vpop.f32.mrb[0].mxu0
        %v1771 = vadd.f32 0.0, %v1770
        %v1772 = vpop.f32.mrb[0].mxu0
        %1773 = vmatprep.mubr.f32.mxu0 0.0
        %1774 = vmatmul.mubr.f32.gmra.mrb[0].mxu0 %v1641
        %v1775 = vpop.f32.mrb[0].mxu0
        %v1776 = vadd.f32 0.0, %v1775
        %v1777 = vpop.f32.mrb[0].mxu0
        %1778 = vmatprep.mubr.f32.mxu0 0.0
        %1779 = vmatmul.mubr.f32.gmra.mrb[0].mxu0 %v1644
        %v1780 = vpop.f32.mrb[0].mxu0
        %v1781 = vadd.f32 0.0, %v1780
        %v1782 = vpop.f32.mrb[0].mxu0
        %1783 = vmatprep.mubr.f32.mxu0 0.0
        %1784 = vmatmul.mubr.f32.gmra.mrb[0].mxu0 %v1647
        %v1785 = vpop.f32.mrb[0].mxu0
        %v1786 = vadd.f32 0.0, %v1785
        %v1787 = vpop.f32.mrb[0].mxu0
        %1788 = vmatprep.mubr.f32.mxu0 0.0
        %1789 = vmatmul.mubr.f32.gmra.mrb[0].mxu0 %v1650
        %v1790 = vpop.f32.mrb[0].mxu0
        %v1791 = vadd.f32 0.0, %v1790
        %v1792 = vpop.f32.mrb[0].mxu0
        %1793 = vmatprep.mubr.f32.mxu0 0.0
        %1794 = vmatmul.mubr.f32.gmra.mrb[0].mxu0 %v1653
        %v1795 = vpop.f32.mrb[0].mxu0
        %v1796 = vadd.f32 0.0, %v1795
        %v1797 = vpop.f32.mrb[0].mxu0
        %1798 = vmatprep.mubr.f32.mxu0 0.0
        %1799 = vmatmul.mubr.f32.gmra.mrb[0].mxu0 %v1656
        %v1800 = vpop.f32.mrb[0].mxu0
        %v1801 = vadd.f32 0.0, %v1800
        %v1802 = vpop.f32.mrb[0].mxu0
        %1803 = vmatprep.mubr.f32.mxu0 0.0
        %1804 = vmatmul.mubr.f32.gmra.mrb[0].mxu0 %v1659
        %v1805 = vpop.f32.mrb[0].mxu0
        %v1806 = vadd.f32 0.0, %v1805
        %v1807 = vpop.f32.mrb[0].mxu0
        %1808 = vdwg.mxu0
        %v1809 = vadd.f32 %v1595, %v1731
        %v1810 = vadd.f32 %v1596, %v1736
        %v1811 = vadd.f32 %v1597, %v1741
        %v1812 = vadd.f32 %v1598, %v1746
        %v1813 = vadd.f32 %v1599, %v1751
        %v1814 = vadd.f32 %v1600, %v1756
        %v1815 = vadd.f32 %v1601, %v1761
        %v1816 = vadd.f32 %v1602, %v1766
        %v1817 = vadd.f32 %v1603, %v1771
        %v1818 = vadd.f32 %v1604, %v1776
        %v1819 = vadd.f32 %v1605, %v1781
        %v1820 = vadd.f32 %v1606, %v1786
        %v1821 = vadd.f32 %v1607, %v1791
        %v1822 = vadd.f32 %v1608, %v1796
        %v1823 = vadd.f32 %v1609, %v1801
        %v1824 = vadd.f32 %v1610, %v1806
        %1825 = vst [vmem:[#allocation2] sm:$0xff] %v1809
        %1826 = vst [vmem:[#allocation2 + $0x8] sm:$0xff] %v1810
        %1827 = vst [vmem:[#allocation2 + $0x10] sm:$0xff] %v1811
        %1828 = vst [vmem:[#allocation2 + $0x18] sm:$0xff] %v1812
        %1829 = vst [vmem:[#allocation2 + $0x20] sm:$0xff] %v1813
        %1830 = vst [vmem:[#allocation2 + $0x28] sm:$0xff] %v1814
        %1831 = vst [vmem:[#allocation2 + $0x30] sm:$0xff] %v1815
        %1832 = vst [vmem:[#allocation2 + $0x38] sm:$0xff] %v1816
        %1833 = vst [vmem:[#allocation2 + $0x40] sm:$0xff] %v1817
        %1834 = vst [vmem:[#allocation2 + $0x48] sm:$0xff] %v1818
        %1835 = vst [vmem:[#allocation2 + $0x50] sm:$0xff] %v1819
        %1836 = vst [vmem:[#allocation2 + $0x58] sm:$0xff] %v1820
        %1837 = vst [vmem:[#allocation2 + $0x60] sm:$0xff] %v1821
        %1838 = vst [vmem:[#allocation2 + $0x68] sm:$0xff] %v1822
        %1839 = vst [vmem:[#allocation2 + $0x70] sm:$0xff] %v1823
        %1840 = vst [vmem:[#allocation2 + $0x78] sm:$0xff] %v1824
        %v1841 = vld [vmem:[#allocation2] sm:$0xff]
        %v1842 = vld [vmem:[#allocation2 + $0x8] sm:$0xff]
        %v1843 = vld [vmem:[#allocation2 + $0x10] sm:$0xff]
        %v1844 = vld [vmem:[#allocation2 + $0x18] sm:$0xff]
        %v1845 = vld [vmem:[#allocation2 + $0x20] sm:$0xff]
        %v1846 = vld [vmem:[#allocation2 + $0x28] sm:$0xff]
        %v1847 = vld [vmem:[#allocation2 + $0x30] sm:$0xff]
        %v1848 = vld [vmem:[#allocation2 + $0x38] sm:$0xff]
        %v1849 = vld [vmem:[#allocation2 + $0x40] sm:$0xff]
        %v1850 = vld [vmem:[#allocation2 + $0x48] sm:$0xff]
        %v1851 = vld [vmem:[#allocation2 + $0x50] sm:$0xff]
        %v1852 = vld [vmem:[#allocation2 + $0x58] sm:$0xff]
        %v1853 = vld [vmem:[#allocation2 + $0x60] sm:$0xff]
        %v1854 = vld [vmem:[#allocation2 + $0x68] sm:$0xff]
        %v1855 = vld [vmem:[#allocation2 + $0x70] sm:$0xff]
        %v1856 = vld [vmem:[#allocation2 + $0x78] sm:$0xff]
        %s1857 = scalar_lea.vmem %s1, 20
        %v1858 = vld [vmem:[%s1857] sm:$0xf]
        %v1860 = vsel %vm263, %v1591, 0
        %v1863 = vsel %vm263, %v1592, 0
        %v1866 = vsel %vm312, %v1858, 0
        %1868 = vmatprep.subr.mxu0 0.0
        %1869 = vmatpush1.msra.mxu0 %v1866
        %1870 = vmatprep.subr.mxu0 0.0
        %1871 = vmatpush1.msra.mxu0 0.0
        %1872 = vmatprep.subr.mxu0 0.0
        %1873 = vmatpush1.msra.mxu0 0.0
        %1874 = vmatprep.subr.mxu0 0.0
        %1875 = vmatpush1.msra.mxu0 0.0
        %1876 = vmatprep.subr.mxu0 0.0
        %1877 = vmatpush1.msra.mxu0 0.0
        %1878 = vmatprep.subr.mxu0 0.0
        %1879 = vmatpush1.msra.mxu0 0.0
        %1880 = vmatprep.subr.mxu0 0.0
        %1881 = vmatpush1.msra.mxu0 0.0
        %1882 = vmatprep.subr.mxu0 0.0
        %1883 = vmatpush1.msra.mxu0 0.0
        %1884 = vmatprep.subr.mxu0 0.0
        %1885 = vmatpush1.msra.mxu0 0.0
        %1886 = vmatprep.subr.mxu0 0.0
        %1887 = vmatpush1.msra.mxu0 0.0
        %1888 = vmatprep.subr.mxu0 0.0
        %1889 = vmatpush1.msra.mxu0 0.0
        %1890 = vmatprep.subr.mxu0 0.0
        %1891 = vmatpush1.msra.mxu0 0.0
        %1892 = vmatprep.subr.mxu0 0.0
        %1893 = vmatpush1.msra.mxu0 0.0
        %1894 = vmatprep.subr.mxu0 0.0
        %1895 = vmatpush1.msra.mxu0 0.0
        %1896 = vmatprep.subr.mxu0 0.0
        %1897 = vmatpush1.msra.mxu0 0.0
        %1898 = vmatprep.subr.mxu0 0.0
        %1899 = vmatpush1.msra.mxu0 0.0
        %1900 = vmatprep.subr.mxu0 0.0
        %1901 = vmatpush1.msra.mxu0 0.0
        %1902 = vmatprep.subr.mxu0 0.0
        %1903 = vmatpush1.msra.mxu0 0.0
        %1904 = vmatprep.subr.mxu0 0.0
        %1905 = vmatpush1.msra.mxu0 0.0
        %1906 = vmatprep.subr.mxu0 0.0
        %1907 = vmatpush1.msra.mxu0 0.0
        %1908 = vmatprep.subr.mxu0 0.0
        %1909 = vmatpush1.msra.mxu0 0.0
        %1910 = vmatprep.subr.mxu0 0.0
        %1911 = vmatpush1.msra.mxu0 0.0
        %1912 = vmatprep.subr.mxu0 0.0
        %1913 = vmatpush1.msra.mxu0 0.0
        %1914 = vmatprep.subr.mxu0 0.0
        %1915 = vmatpush1.msra.mxu0 0.0
        %1916 = vmatprep.subr.mxu0 0.0
        %1917 = vmatpush1.msra.mxu0 0.0
        %1918 = vmatprep.subr.mxu0 0.0
        %1919 = vmatpush1.msra.mxu0 0.0
        %1920 = vmatprep.subr.mxu0 0.0
        %1921 = vmatpush1.msra.mxu0 0.0
        %1922 = vmatprep.subr.mxu0 0.0
        %1923 = vmatpush1.msra.mxu0 0.0
        %1924 = vmatprep.subr.mxu0 0.0
        %1925 = vmatpush1.msra.mxu0 0.0
        %1926 = vmatprep.subr.mxu0 0.0
        %1927 = vmatpush1.msra.mxu0 0.0
        %1928 = vmatprep.subr.mxu0 0.0
        %1929 = vmatpush1.msra.mxu0 0.0
        %1930 = vmatprep.subr.mxu0 0.0
        %1931 = vmatpush1.msra.mxu0 0.0
        %1932 = vmatprep.mubr.f32.mxu0 0.0
        %1933 = vmatmul.mubr.f32.gmra.mrb[0].mxu0 %v1620
        %v1934 = vpop.f32.mrb[0].mxu0
        %v1935 = vadd.f32 0.0, %v1934
        %v1936 = vpop.f32.mrb[0].mxu0
        %1937 = vmatprep.mubr.f32.mxu0 0.0
        %1938 = vmatmul.mubr.f32.gmra.mrb[0].mxu0 %v1623
        %v1939 = vpop.f32.mrb[0].mxu0
        %v1940 = vadd.f32 0.0, %v1939
        %v1941 = vpop.f32.mrb[0].mxu0
        %1942 = vmatprep.mubr.f32.mxu0 0.0
        %1943 = vmatmul.mubr.f32.gmra.mrb[0].mxu0 %v1626
        %v1944 = vpop.f32.mrb[0].mxu0
        %v1945 = vadd.f32 0.0, %v1944
        %v1946 = vpop.f32.mrb[0].mxu0
        %1947 = vmatprep.mubr.f32.mxu0 0.0
        %1948 = vmatmul.mubr.f32.gmra.mrb[0].mxu0 %v1629
        %v1949 = vpop.f32.mrb[0].mxu0
        %v1950 = vadd.f32 0.0, %v1949
        %v1951 = vpop.f32.mrb[0].mxu0
        %1952 = vmatprep.mubr.f32.mxu0 0.0
        %1953 = vmatmul.mubr.f32.gmra.mrb[0].mxu0 %v1632
        %v1954 = vpop.f32.mrb[0].mxu0
        %v1955 = vadd.f32 0.0, %v1954
        %v1956 = vpop.f32.mrb[0].mxu0
        %1957 = vmatprep.mubr.f32.mxu0 0.0
        %1958 = vmatmul.mubr.f32.gmra.mrb[0].mxu0 %v1635
        %v1959 = vpop.f32.mrb[0].mxu0
        %v1960 = vadd.f32 0.0, %v1959
        %v1961 = vpop.f32.mrb[0].mxu0
        %1962 = vmatprep.mubr.f32.mxu0 0.0
        %1963 = vmatmul.mubr.f32.gmra.mrb[0].mxu0 %v1638
        %v1964 = vpop.f32.mrb[0].mxu0
        %v1965 = vadd.f32 0.0, %v1964
        %v1966 = vpop.f32.mrb[0].mxu0
        %1967 = vmatprep.mubr.f32.mxu0 0.0
        %1968 = vmatmul.mubr.f32.gmra.mrb[0].mxu0 %v1641
        %v1969 = vpop.f32.mrb[0].mxu0
        %v1970 = vadd.f32 0.0, %v1969
        %v1971 = vpop.f32.mrb[0].mxu0
        %1972 = vmatprep.mubr.f32.mxu0 0.0
        %1973 = vmatmul.mubr.f32.gmra.mrb[0].mxu0 %v1644
        %v1974 = vpop.f32.mrb[0].mxu0
        %v1975 = vadd.f32 0.0, %v1974
        %v1976 = vpop.f32.mrb[0].mxu0
        %1977 = vmatprep.mubr.f32.mxu0 0.0
        %1978 = vmatmul.mubr.f32.gmra.mrb[0].mxu0 %v1647
        %v1979 = vpop.f32.mrb[0].mxu0
        %v1980 = vadd.f32 0.0, %v1979
        %v1981 = vpop.f32.mrb[0].mxu0
        %1982 = vmatprep.mubr.f32.mxu0 0.0
        %1983 = vmatmul.mubr.f32.gmra.mrb[0].mxu0 %v1650
        %v1984 = vpop.f32.mrb[0].mxu0
        %v1985 = vadd.f32 0.0, %v1984
        %v1986 = vpop.f32.mrb[0].mxu0
        %1987 = vmatprep.mubr.f32.mxu0 0.0
        %1988 = vmatmul.mubr.f32.gmra.mrb[0].mxu0 %v1653
        %v1989 = vpop.f32.mrb[0].mxu0
        %v1990 = vadd.f32 0.0, %v1989
        %v1991 = vpop.f32.mrb[0].mxu0
        %1992 = vmatprep.mubr.f32.mxu0 0.0
        %1993 = vmatmul.mubr.f32.gmra.mrb[0].mxu0 %v1656
        %v1994 = vpop.f32.mrb[0].mxu0
        %v1995 = vadd.f32 0.0, %v1994
        %v1996 = vpop.f32.mrb[0].mxu0
        %1997 = vmatprep.mubr.f32.mxu0 0.0
        %1998 = vmatmul.mubr.f32.gmra.mrb[0].mxu0 %v1659
        %v1999 = vpop.f32.mrb[0].mxu0
        %v2000 = vadd.f32 0.0, %v1999
        %v2001 = vpop.f32.mrb[0].mxu0
        %2002 = vmatprep.mubr.f32.mxu0 0.0
        %2003 = vmatmul.mubr.f32.gmra.mrb[0].mxu0 %v1860
        %v2004 = vpop.f32.mrb[0].mxu0
        %v2005 = vadd.f32 0.0, %v2004
        %v2006 = vpop.f32.mrb[0].mxu0
        %2007 = vmatprep.mubr.f32.mxu0 0.0
        %2008 = vmatmul.mubr.f32.gmra.mrb[0].mxu0 %v1863
        %v2009 = vpop.f32.mrb[0].mxu0
        %v2010 = vadd.f32 0.0, %v2009
        %v2011 = vpop.f32.mrb[0].mxu0
        %2012 = vdwg.mxu0
        %v2013 = vadd.f32 %v1841, %v1935
        %v2014 = vadd.f32 %v1842, %v1940
        %v2015 = vadd.f32 %v1843, %v1945
        %v2016 = vadd.f32 %v1844, %v1950
        %v2017 = vadd.f32 %v1845, %v1955
        %v2018 = vadd.f32 %v1846, %v1960
        %v2019 = vadd.f32 %v1847, %v1965
        %v2020 = vadd.f32 %v1848, %v1970
        %v2021 = vadd.f32 %v1849, %v1975
        %v2022 = vadd.f32 %v1850, %v1980
        %v2023 = vadd.f32 %v1851, %v1985
        %v2024 = vadd.f32 %v1852, %v1990
        %v2025 = vadd.f32 %v1853, %v1995
        %v2026 = vadd.f32 %v1854, %v2000
        %v2027 = vadd.f32 %v1855, %v2005
        %v2028 = vadd.f32 %v1856, %v2010
        %2029 = vst [vmem:[#allocation2] sm:$0xff] %v2013
        %2030 = vst [vmem:[#allocation2 + $0x8] sm:$0xff] %v2014
        %2031 = vst [vmem:[#allocation2 + $0x10] sm:$0xff] %v2015
        %2032 = vst [vmem:[#allocation2 + $0x18] sm:$0xff] %v2016
        %2033 = vst [vmem:[#allocation2 + $0x20] sm:$0xff] %v2017
        %2034 = vst [vmem:[#allocation2 + $0x28] sm:$0xff] %v2018
        %2035 = vst [vmem:[#allocation2 + $0x30] sm:$0xff] %v2019
        %2036 = vst [vmem:[#allocation2 + $0x38] sm:$0xff] %v2020
        %2037 = vst [vmem:[#allocation2 + $0x40] sm:$0xff] %v2021
        %2038 = vst [vmem:[#allocation2 + $0x48] sm:$0xff] %v2022
        %2039 = vst [vmem:[#allocation2 + $0x50] sm:$0xff] %v2023
        %2040 = vst [vmem:[#allocation2 + $0x58] sm:$0xff] %v2024
        %2041 = vst [vmem:[#allocation2 + $0x60] sm:$0xff] %v2025
        %2042 = vst [vmem:[#allocation2 + $0x68] sm:$0xff] %v2026
        %2043 = vst [vmem:[#allocation2 + $0x70] sm:$0xff] %v2027
        %2044 = vst [vmem:[#allocation2 + $0x78] sm:$0xff] %v2028
        %v2045 = vld [vmem:[#allocation2] sm:$0xff]
        %v2046 = vld [vmem:[#allocation2 + $0x8] sm:$0xff]
        %v2047 = vld [vmem:[#allocation2 + $0x10] sm:$0xff]
        %v2048 = vld [vmem:[#allocation2 + $0x18] sm:$0xff]
        %v2049 = vld [vmem:[#allocation2 + $0x20] sm:$0xff]
        %v2050 = vld [vmem:[#allocation2 + $0x28] sm:$0xff]
        %v2051 = vld [vmem:[#allocation2 + $0x30] sm:$0xff]
        %v2052 = vld [vmem:[#allocation2 + $0x38] sm:$0xff]
        %v2053 = vld [vmem:[#allocation2 + $0x40] sm:$0xff]
        %v2054 = vld [vmem:[#allocation2 + $0x48] sm:$0xff]
        %v2055 = vld [vmem:[#allocation2 + $0x50] sm:$0xff]
        %v2056 = vld [vmem:[#allocation2 + $0x58] sm:$0xff]
        %v2057 = vld [vmem:[#allocation2 + $0x60] sm:$0xff]
        %v2058 = vld [vmem:[#allocation2 + $0x68] sm:$0xff]
        %v2059 = vld [vmem:[#allocation2 + $0x70] sm:$0xff]
        %v2060 = vld [vmem:[#allocation2 + $0x78] sm:$0xff]
        %s2061 = scalar_lea.vmem %s1, 32
        %v2062 = vld [vmem:[%s2061] sm:$0xf]
        %v2064 = vsel %vm263, %v1593, 0
        %v2067 = vsel %vm263, %v1594, 0
        %v2070 = vsel %vm312, %v2062, 0
        %2072 = vmatprep.subr.mxu0 0.0
        %2073 = vmatpush1.msra.mxu0 %v2070
        %2074 = vmatprep.subr.mxu0 0.0
        %2075 = vmatpush1.msra.mxu0 0.0
        %2076 = vmatprep.subr.mxu0 0.0
        %2077 = vmatpush1.msra.mxu0 0.0
        %2078 = vmatprep.subr.mxu0 0.0
        %2079 = vmatpush1.msra.mxu0 0.0
        %2080 = vmatprep.subr.mxu0 0.0
        %2081 = vmatpush1.msra.mxu0 0.0
        %2082 = vmatprep.subr.mxu0 0.0
        %2083 = vmatpush1.msra.mxu0 0.0
        %2084 = vmatprep.subr.mxu0 0.0
        %2085 = vmatpush1.msra.mxu0 0.0
        %2086 = vmatprep.subr.mxu0 0.0
        %2087 = vmatpush1.msra.mxu0 0.0
        %2088 = vmatprep.subr.mxu0 0.0
        %2089 = vmatpush1.msra.mxu0 0.0
        %2090 = vmatprep.subr.mxu0 0.0
        %2091 = vmatpush1.msra.mxu0 0.0
        %2092 = vmatprep.subr.mxu0 0.0
        %2093 = vmatpush1.msra.mxu0 0.0
        %2094 = vmatprep.subr.mxu0 0.0
        %2095 = vmatpush1.msra.mxu0 0.0
        %2096 = vmatprep.subr.mxu0 0.0
        %2097 = vmatpush1.msra.mxu0 0.0
        %2098 = vmatprep.subr.mxu0 0.0
        %2099 = vmatpush1.msra.mxu0 0.0
        %2100 = vmatprep.subr.mxu0 0.0
        %2101 = vmatpush1.msra.mxu0 0.0
        %2102 = vmatprep.subr.mxu0 0.0
        %2103 = vmatpush1.msra.mxu0 0.0
        %2104 = vmatprep.subr.mxu0 0.0
        %2105 = vmatpush1.msra.mxu0 0.0
        %2106 = vmatprep.subr.mxu0 0.0
        %2107 = vmatpush1.msra.mxu0 0.0
        %2108 = vmatprep.subr.mxu0 0.0
        %2109 = vmatpush1.msra.mxu0 0.0
        %2110 = vmatprep.subr.mxu0 0.0
        %2111 = vmatpush1.msra.mxu0 0.0
        %2112 = vmatprep.subr.mxu0 0.0
        %2113 = vmatpush1.msra.mxu0 0.0
        %2114 = vmatprep.subr.mxu0 0.0
        %2115 = vmatpush1.msra.mxu0 0.0
        %2116 = vmatprep.subr.mxu0 0.0
        %2117 = vmatpush1.msra.mxu0 0.0
        %2118 = vmatprep.subr.mxu0 0.0
        %2119 = vmatpush1.msra.mxu0 0.0
        %2120 = vmatprep.subr.mxu0 0.0
        %2121 = vmatpush1.msra.mxu0 0.0
        %2122 = vmatprep.subr.mxu0 0.0
        %2123 = vmatpush1.msra.mxu0 0.0
        %2124 = vmatprep.subr.mxu0 0.0
        %2125 = vmatpush1.msra.mxu0 0.0
        %2126 = vmatprep.subr.mxu0 0.0
        %2127 = vmatpush1.msra.mxu0 0.0
        %2128 = vmatprep.subr.mxu0 0.0
        %2129 = vmatpush1.msra.mxu0 0.0
        %2130 = vmatprep.subr.mxu0 0.0
        %2131 = vmatpush1.msra.mxu0 0.0
        %2132 = vmatprep.subr.mxu0 0.0
        %2133 = vmatpush1.msra.mxu0 0.0
        %2134 = vmatprep.subr.mxu0 0.0
        %2135 = vmatpush1.msra.mxu0 0.0
        %2136 = vmatprep.mubr.f32.mxu0 0.0
        %2137 = vmatmul.mubr.f32.gmra.mrb[0].mxu0 %v1626
        %v2138 = vpop.f32.mrb[0].mxu0
        %v2139 = vadd.f32 0.0, %v2138
        %v2140 = vpop.f32.mrb[0].mxu0
        %2141 = vmatprep.mubr.f32.mxu0 0.0
        %2142 = vmatmul.mubr.f32.gmra.mrb[0].mxu0 %v1629
        %v2143 = vpop.f32.mrb[0].mxu0
        %v2144 = vadd.f32 0.0, %v2143
        %v2145 = vpop.f32.mrb[0].mxu0
        %2146 = vmatprep.mubr.f32.mxu0 0.0
        %2147 = vmatmul.mubr.f32.gmra.mrb[0].mxu0 %v1632
        %v2148 = vpop.f32.mrb[0].mxu0
        %v2149 = vadd.f32 0.0, %v2148
        %v2150 = vpop.f32.mrb[0].mxu0
        %2151 = vmatprep.mubr.f32.mxu0 0.0
        %2152 = vmatmul.mubr.f32.gmra.mrb[0].mxu0 %v1635
        %v2153 = vpop.f32.mrb[0].mxu0
        %v2154 = vadd.f32 0.0, %v2153
        %v2155 = vpop.f32.mrb[0].mxu0
        %2156 = vmatprep.mubr.f32.mxu0 0.0
        %2157 = vmatmul.mubr.f32.gmra.mrb[0].mxu0 %v1638
        %v2158 = vpop.f32.mrb[0].mxu0
        %v2159 = vadd.f32 0.0, %v2158
        %v2160 = vpop.f32.mrb[0].mxu0
        %2161 = vmatprep.mubr.f32.mxu0 0.0
        %2162 = vmatmul.mubr.f32.gmra.mrb[0].mxu0 %v1641
        %v2163 = vpop.f32.mrb[0].mxu0
        %v2164 = vadd.f32 0.0, %v2163
        %v2165 = vpop.f32.mrb[0].mxu0
        %2166 = vmatprep.mubr.f32.mxu0 0.0
        %2167 = vmatmul.mubr.f32.gmra.mrb[0].mxu0 %v1644
        %v2168 = vpop.f32.mrb[0].mxu0
        %v2169 = vadd.f32 0.0, %v2168
        %v2170 = vpop.f32.mrb[0].mxu0
        %2171 = vmatprep.mubr.f32.mxu0 0.0
        %2172 = vmatmul.mubr.f32.gmra.mrb[0].mxu0 %v1647
        %v2173 = vpop.f32.mrb[0].mxu0
        %v2174 = vadd.f32 0.0, %v2173
        %v2175 = vpop.f32.mrb[0].mxu0
        %2176 = vmatprep.mubr.f32.mxu0 0.0
        %2177 = vmatmul.mubr.f32.gmra.mrb[0].mxu0 %v1650
        %v2178 = vpop.f32.mrb[0].mxu0
        %v2179 = vadd.f32 0.0, %v2178
        %v2180 = vpop.f32.mrb[0].mxu0
        %2181 = vmatprep.mubr.f32.mxu0 0.0
        %2182 = vmatmul.mubr.f32.gmra.mrb[0].mxu0 %v1653
        %v2183 = vpop.f32.mrb[0].mxu0
        %v2184 = vadd.f32 0.0, %v2183
        %v2185 = vpop.f32.mrb[0].mxu0
        %2186 = vmatprep.mubr.f32.mxu0 0.0
        %2187 = vmatmul.mubr.f32.gmra.mrb[0].mxu0 %v1656
        %v2188 = vpop.f32.mrb[0].mxu0
        %v2189 = vadd.f32 0.0, %v2188
        %v2190 = vpop.f32.mrb[0].mxu0
        %2191 = vmatprep.mubr.f32.mxu0 0.0
        %2192 = vmatmul.mubr.f32.gmra.mrb[0].mxu0 %v1659
        %v2193 = vpop.f32.mrb[0].mxu0
        %v2194 = vadd.f32 0.0, %v2193
        %v2195 = vpop.f32.mrb[0].mxu0
        %2196 = vmatprep.mubr.f32.mxu0 0.0
        %2197 = vmatmul.mubr.f32.gmra.mrb[0].mxu0 %v1860
        %v2198 = vpop.f32.mrb[0].mxu0
        %v2199 = vadd.f32 0.0, %v2198
        %v2200 = vpop.f32.mrb[0].mxu0
        %2201 = vmatprep.mubr.f32.mxu0 0.0
        %2202 = vmatmul.mubr.f32.gmra.mrb[0].mxu0 %v1863
        %v2203 = vpop.f32.mrb[0].mxu0
        %v2204 = vadd.f32 0.0, %v2203
        %v2205 = vpop.f32.mrb[0].mxu0
        %2206 = vmatprep.mubr.f32.mxu0 0.0
        %2207 = vmatmul.mubr.f32.gmra.mrb[0].mxu0 %v2064
        %v2208 = vpop.f32.mrb[0].mxu0
        %v2209 = vadd.f32 0.0, %v2208
        %v2210 = vpop.f32.mrb[0].mxu0
        %2211 = vmatprep.mubr.f32.mxu0 0.0
        %2212 = vmatmul.mubr.f32.gmra.mrb[0].mxu0 %v2067
        %v2213 = vpop.f32.mrb[0].mxu0
        %v2214 = vadd.f32 0.0, %v2213
        %v2215 = vpop.f32.mrb[0].mxu0
        %2216 = vdwg.mxu0
        %v2217 = vadd.f32 %v2045, %v2139
        %v2218 = vadd.f32 %v2046, %v2144
        %v2219 = vadd.f32 %v2047, %v2149
        %v2220 = vadd.f32 %v2048, %v2154
        %v2221 = vadd.f32 %v2049, %v2159
        %v2222 = vadd.f32 %v2050, %v2164
        %v2223 = vadd.f32 %v2051, %v2169
        %v2224 = vadd.f32 %v2052, %v2174
        %v2225 = vadd.f32 %v2053, %v2179
        %v2226 = vadd.f32 %v2054, %v2184
        %v2227 = vadd.f32 %v2055, %v2189
        %v2228 = vadd.f32 %v2056, %v2194
        %v2229 = vadd.f32 %v2057, %v2199
        %v2230 = vadd.f32 %v2058, %v2204
        %v2231 = vadd.f32 %v2059, %v2209
        %v2232 = vadd.f32 %v2060, %v2214
        %2233 = vst [vmem:[#allocation2] sm:$0xff] %v2217
        %2234 = vst [vmem:[#allocation2 + $0x8] sm:$0xff] %v2218
        %2235 = vst [vmem:[#allocation2 + $0x10] sm:$0xff] %v2219
        %2236 = vst [vmem:[#allocation2 + $0x18] sm:$0xff] %v2220
        %2237 = vst [vmem:[#allocation2 + $0x20] sm:$0xff] %v2221
        %2238 = vst [vmem:[#allocation2 + $0x28] sm:$0xff] %v2222
        %2239 = vst [vmem:[#allocation2 + $0x30] sm:$0xff] %v2223
        %2240 = vst [vmem:[#allocation2 + $0x38] sm:$0xff] %v2224
        %2241 = vst [vmem:[#allocation2 + $0x40] sm:$0xff] %v2225
        %2242 = vst [vmem:[#allocation2 + $0x48] sm:$0xff] %v2226
        %2243 = vst [vmem:[#allocation2 + $0x50] sm:$0xff] %v2227
        %2244 = vst [vmem:[#allocation2 + $0x58] sm:$0xff] %v2228
        %2245 = vst [vmem:[#allocation2 + $0x60] sm:$0xff] %v2229
        %2246 = vst [vmem:[#allocation2 + $0x68] sm:$0xff] %v2230
        %2247 = vst [vmem:[#allocation2 + $0x70] sm:$0xff] %v2231
        %2248 = vst [vmem:[#allocation2 + $0x78] sm:$0xff] %v2232
        %v2249 = vld [vmem:[#allocation2] sm:$0xff]
        %v2250 = vld [vmem:[#allocation2 + $0x8] sm:$0xff]
        %v2251 = vld [vmem:[#allocation2 + $0x10] sm:$0xff]
        %v2252 = vld [vmem:[#allocation2 + $0x18] sm:$0xff]
        %v2253 = vld [vmem:[#allocation2 + $0x20] sm:$0xff]
        %v2254 = vld [vmem:[#allocation2 + $0x28] sm:$0xff]
        %v2255 = vld [vmem:[#allocation2 + $0x30] sm:$0xff]
        %v2256 = vld [vmem:[#allocation2 + $0x38] sm:$0xff]
        %v2257 = vld [vmem:[#allocation2 + $0x40] sm:$0xff]
        %v2258 = vld [vmem:[#allocation2 + $0x48] sm:$0xff]
        %v2259 = vld [vmem:[#allocation2 + $0x50] sm:$0xff]
        %v2260 = vld [vmem:[#allocation2 + $0x58] sm:$0xff]
        %v2261 = vld [vmem:[#allocation2 + $0x60] sm:$0xff]
        %v2262 = vld [vmem:[#allocation2 + $0x68] sm:$0xff]
        %v2263 = vld [vmem:[#allocation2 + $0x70] sm:$0xff]
        %v2264 = vld [vmem:[#allocation2 + $0x78] sm:$0xff]
        %2265 = vst [vmem:[%s193] sm:$0xff] %v2249
        %2266 = vst [vmem:[%s193 + $0x8] sm:$0xff] %v2250
        %2267 = vst [vmem:[%s193 + $0x10] sm:$0xff] %v2251
        %2268 = vst [vmem:[%s193 + $0x18] sm:$0xff] %v2252
        %2269 = vst [vmem:[%s193 + $0x20] sm:$0xff] %v2253
        %2270 = vst [vmem:[%s193 + $0x28] sm:$0xff] %v2254
        %2271 = vst [vmem:[%s193 + $0x30] sm:$0xff] %v2255
        %2272 = vst [vmem:[%s193 + $0x38] sm:$0xff] %v2256
        %2273 = vst [vmem:[%s193 + $0x40] sm:$0xff] %v2257
        %2274 = vst [vmem:[%s193 + $0x48] sm:$0xff] %v2258
        %2275 = vst [vmem:[%s193 + $0x50] sm:$0xff] %v2259
        %2276 = vst [vmem:[%s193 + $0x58] sm:$0xff] %v2260
        %2277 = vst [vmem:[%s193 + $0x60] sm:$0xff] %v2261
        %2278 = vst [vmem:[%s193 + $0x68] sm:$0xff] %v2262
        %2279 = vst [vmem:[%s193 + $0x70] sm:$0xff] %v2263
        %2280 = vst [vmem:[%s193 + $0x78] sm:$0xff] %v2264
        %v2281 = vadd.f32 %v2249, %v2250
        %v2282 = vadd.f32 %v2281, %v2251
        %v2283 = vadd.f32 %v2282, %v2252
        %v2284 = vadd.f32 %v2283, %v2253
        %v2285 = vadd.f32 %v2284, %v2254
        %v2286 = vadd.f32 %v2285, %v2255
        %v2287 = vadd.f32 %v2286, %v2256
        %v2288 = vadd.f32 %v2287, %v2257
        %v2289 = vadd.f32 %v2288, %v2258
        %v2290 = vadd.f32 %v2289, %v2259
        %v2291 = vadd.f32 %v2290, %v2260
        %v2292 = vadd.f32 %v2291, %v2261
        %v2293 = vadd.f32 %v2292, %v2262
        %v2294 = vadd.f32 %v2293, %v2263
        %v2295 = vadd.f32 %v2294, %v2264
        %v2296 = vrot.slane %v2295, 4
        %v2297 = vadd.f32 %v2295, %v2296
        %v2298 = vrot.slane %v2297, 2
        %v2299 = vadd.f32 %v2297, %v2298
        %v2300 = vrot.slane %v2299, 1
        %v2301 = vadd.f32 %v2299, %v2300
        %v2302 = vmul.f32 %v2249, %v2249
        %v2303 = vmul.f32 %v2250, %v2250
        %v2304 = vmul.f32 %v2251, %v2251
        %v2305 = vmul.f32 %v2252, %v2252
        %v2306 = vmul.f32 %v2253, %v2253
        %v2307 = vmul.f32 %v2254, %v2254
        %v2308 = vmul.f32 %v2255, %v2255
        %v2309 = vmul.f32 %v2256, %v2256
        %v2310 = vmul.f32 %v2257, %v2257
        %v2311 = vmul.f32 %v2258, %v2258
        %v2312 = vmul.f32 %v2259, %v2259
        %v2313 = vmul.f32 %v2260, %v2260
        %v2314 = vmul.f32 %v2261, %v2261
        %v2315 = vmul.f32 %v2262, %v2262
        %v2316 = vmul.f32 %v2263, %v2263
        %v2317 = vmul.f32 %v2264, %v2264
        %v2318 = vadd.f32 %v2302, %v2303
        %v2319 = vadd.f32 %v2318, %v2304
        %v2320 = vadd.f32 %v2319, %v2305
        %v2321 = vadd.f32 %v2320, %v2306
        %v2322 = vadd.f32 %v2321, %v2307
        %v2323 = vadd.f32 %v2322, %v2308
        %v2324 = vadd.f32 %v2323, %v2309
        %v2325 = vadd.f32 %v2324, %v2310
        %v2326 = vadd.f32 %v2325, %v2311
        %v2327 = vadd.f32 %v2326, %v2312
        %v2328 = vadd.f32 %v2327, %v2313
        %v2329 = vadd.f32 %v2328, %v2314
        %v2330 = vadd.f32 %v2329, %v2315
        %v2331 = vadd.f32 %v2330, %v2316
        %v2332 = vadd.f32 %v2331, %v2317
        %v2333 = vrot.slane %v2332, 4
        %v2334 = vadd.f32 %v2332, %v2333
        %v2335 = vrot.slane %v2334, 2
        %v2336 = vadd.f32 %v2334, %v2335
        %v2337 = vrot.slane %v2336, 1
        %v2338 = vadd.f32 %v2336, %v2337
        %vm2339 = vcmask 1040384
        %v2340 = vsel %vm2339, %v2301, %v2338
        %vm2341 = vcmask 1041408
        %v2342 = vsel %vm2341, %v2340, 0.0
        %2343 = vst [vmem:[%s200] sm:$0xff] %v2342
        %s2344 = sand.u32 %s92, 1
        %s2345 = scalar_lea.sflag [#allocation4], %s2344
        %s2346 = sand.u32 %s92, 1
        %s2347 = smul.addr %s2346, 128
        %s2348 = scalar_lea.vmem [#allocation3], %s2347
        %s2349 = sand.u32 %s120, 1
        %s2350 = scalar_lea.sflag [#allocation6], %s2349
        %s2351 = sand.u32 %s120, 1
        %s2352 = smul.addr %s2351, 8
        %s2353 = scalar_lea.vmem [#allocation5], %s2352
        // Predicated region
        $region29: #{tpu_custom_call.1} parent=27 // pred_check
          %p2354 = pneg %p102
        $region30: #{tpu_custom_call.1} parent=27 // pred_check_branch
          %2356 = sbr.rel (%p2354) target = $region32
        $region31: #{tpu_custom_call.1} parent=27 // pred_region
          %s2358 = ssub.s32 2048, 2048
          %2359 = vsyncadd %s2345, %s2358
          %s2360 = smul.addr %s26, 16
          %s2361 = smul.addr %s25, 32
          %s2362 = sadd.s32 %s2360, %s2361
          %s2363 = smul.addr %s2362, 128
          %s2364 = scalar_lea.hbm %s2, %s2363
          %s2365 = sshll.u32 %s2348, 4
          %s2366 = int_to_ptr.vmem [resolvable:$true] %s2365
          %2371 = dma.vmem_to_hbm [thread:$0]  %s2366, 2048, %s2364, %s2345, 128, 128, 8
        $region32: #{tpu_custom_call.1} parent=27 // pred_fallthru
          _
        // Predicated region
        $region33: #{tpu_custom_call.1} parent=27 // pred_check
          %p2372 = pneg %p130
        $region34: #{tpu_custom_call.1} parent=27 // pred_check_branch
          %2374 = sbr.rel (%p2372) target = $region36
        $region35: #{tpu_custom_call.1} parent=27 // pred_region
          %s2376 = ssub.s32 128, 128
          %2377 = vsyncadd %s2350, %s2376
          %s2378 = smul.addr %s25, 2
          %s2379 = sadd.s32 %s26, %s2378
          %s2380 = smul.addr %s2379, 128
          %s2381 = scalar_lea.hbm %s3, %s2380
          %s2383 = sshll.u32 %s2353, 4
          %s2384 = int_to_ptr.vmem [resolvable:$true] %s2383
          %2386 = dma.vmem_to_hbm [thread:$0]  %s2384, 128, %s2381, %s2350
        $region36: #{tpu_custom_call.1} parent=27 // pred_fallthru
          _
      $region28: #{tpu_custom_call.1} parent=5 // pred_fallthru
        _
      %p2387 = scmp.le.s32.totalorder 2, %s16
      // Predicated region
      $region37: #{tpu_custom_call.1} parent=5 // pred_check
        %p2388 = pneg %p2387
      $region38: #{tpu_custom_call.1} parent=5 // pred_check_branch
        %2390 = sbr.rel (%p2388) target = $region40
      $region39: #{tpu_custom_call.1} parent=5 // pred_region
        %s2391 = ssub.s32 %s16, 2
        // Predicated region
        $region41: #{tpu_custom_call.1} parent=39 // pred_check
          %p2392 = pneg %p108
        $region42: #{tpu_custom_call.1} parent=39 // pred_check_branch
          %2394 = sbr.rel (%p2392) target = $region44
        $region43: #{tpu_custom_call.1} parent=39 // pred_region
          %s2395 = sand.u32 %s93, 1
          %s2396 = scalar_lea.sflag [#allocation4], %s2395
          %s2397 = sand.u32 %s93, 1
          %s2398 = smul.addr %s2397, 128
          %s2399 = scalar_lea.vmem [#allocation3], %s2398
          %2400 = dma.done %s2396, 2048
        $region44: #{tpu_custom_call.1} parent=39 // pred_fallthru
          _
        // Predicated region
        $region45: #{tpu_custom_call.1} parent=39 // pred_check
          %p2401 = pneg %p136
        $region46: #{tpu_custom_call.1} parent=39 // pred_check_branch
          %2403 = sbr.rel (%p2401) target = $region48
        $region47: #{tpu_custom_call.1} parent=39 // pred_region
          %s2404 = sand.u32 %s121, 1
          %s2405 = scalar_lea.sflag [#allocation6], %s2404
          %s2406 = sand.u32 %s121, 1
          %s2407 = smul.addr %s2406, 8
          %s2408 = scalar_lea.vmem [#allocation5], %s2407
          %2409 = dma.done %s2405, 128
        $region48: #{tpu_custom_call.1} parent=39 // pred_fallthru
          _
      $region40: #{tpu_custom_call.1} parent=5 // pred_fallthru
        _
    $region6: #{tpu_custom_call.1} parent=1 // loop_footer
      %s20 = sadd.s32 1, %s16
    $region7: #{tpu_custom_call.1} parent=1 // loop_footer_branch
      %15 = sbr.rel target = $region3
    $region8: #{tpu_custom_call.1} parent=1 // loop_exit
      _
    %2410 = vsyncpa [#allocation4], 1
    %s2411 = scalar_lea.sflag [#allocation4], 1
    %2412 = vsyncpa %s2411, 1
    %2413 = vsyncpa [#allocation6], 1
    %s2414 = scalar_lea.sflag [#allocation6], 1
    %2415 = vsyncpa %s2414, 1

</llo_original>
